<compile_context>
chip_gen: v6e
topology: v6e:2x2x1
jax: 0.10.0
libtpu: 0.0.40
codegen_flags: <defaults>
</compile_context>

<pallas_src>
import numpy as np
import jax
import jax.numpy as jnp
from jax.experimental import pallas as pl
from jax.experimental.pallas import tpu as pltpu

# ---- constants from the PyTorch module --------------------------------------
A0 = -0.9602
A1 = -0.628
A2 = -2.1831
A3 = 1.5359
B1 = 1.6686
B2 = 1.2363
B3 = -1.1509
C1 = 0.5227
C2 = -1.8543
C3 = -0.045
D0 = -1.204
D1 = -1.2903
D2 = -1.5158
D3 = -0.221
E1 = 0.6489
E2 = 0.8607
E3 = -0.8444
F1 = 0.2612
F2 = -0.4397
F3 = 1.0842

Z_CONST = -1.9875
TIME_STEP = 0.3     # module overrides TimeStep to 0.3 in __init__
ITER_NUM = 3        # module overrides IterNum to 3 in __init__
ALPHA = 0.01


# ---- elementwise pieces (op order matches the torch module exactly) ----------
def _memristive(vm, mem):
    """MemristiveFunc: returns (Imem, updated mem); mem updated BEFORE V2/V3."""
    p1 = A0 + A1 * vm + A2 * vm * vm + A3 * vm * vm * vm
    p2 = B1 * mem + B2 * mem * mem + B3 * mem * mem * mem
    p3 = C1 * vm * mem + C2 * vm * mem * mem + C3 * vm * vm * mem
    mem = mem + TIME_STEP * (p1 + p2 + p3)
    v1 = D0 + D1 * vm + D2 * vm * vm + D3 * vm * vm * vm
    v2 = E1 * mem + E2 * mem * mem + E3 * mem * mem * mem
    v3 = F1 * vm * mem + F2 * vm * mem * mem + F3 * vm * vm * mem
    return vm * (v1 + v2 + v3), mem


def _leaky(x, alpha=ALPHA):
    y = jnp.minimum(x, 1.0 + alpha * (x - 1.0))
    return jnp.maximum(y, -1.0 + alpha * (y + 1.0))


# ---- Pallas kernel: the whole iterative dynamical hot path -------------------
def memcenn_kernel(params_ref, slab_ref, out_ref):
    """params_ref: SMEM f32[6]  = [aC, a01, a10, bC, b01, b10]
       slab_ref:   VMEM f32[4,N]: rows 0-1 = x (W axis), rows 2-3 = init mem
       out_ref:    VMEM f32[(ITER_NUM+1)*2, N]: rows [2s, 2s+1] = state after
                   step s, last two rows = final Output."""
    a_c, a01, a10 = params_ref[0], params_ref[1], params_ref[2]
    b_c, b01, b10 = params_ref[3], params_ref[4], params_ref[5]

    x0 = slab_ref[0:1, :]
    x1 = slab_ref[1:2, :]
    mem0 = slab_ref[2:3, :]
    mem1 = slab_ref[3:4, :]

    # InputCoupling = B(x) + Z.  The padded 3x3 conv on a 1x2 grid collapses to
    # a 2x2 banded operator built from the middle kernel row (scalar FMAs only).
    ic0 = b_c * x0 + b01 * x1 + Z_CONST
    ic1 = b10 * x0 + b_c * x1 + Z_CONST

    out0, out1 = x0, x1
    for s in range(ITER_NUM):
        imem0, mem0 = _memristive(x0, mem0)
        imem1, mem1 = _memristive(x1, mem1)
        out0 = _leaky(x0)
        out1 = _leaky(x1)
        # Coupling = A(Output) + InputCoupling - Imem ; explicit Euler update.
        c0 = a_c * out0 + a01 * out1 + ic0 - imem0
        c1 = a10 * out0 + a_c * out1 + ic1 - imem1
        x0 = x0 + TIME_STEP * (-x0 + c0)
        x1 = x1 + TIME_STEP * (-x1 + c1)
        # Direct per-step stores into the lane-dense output slab (no concat).
        out_ref[2 * s:2 * s + 1, :] = x0
        out_ref[2 * s + 1:2 * s + 2, :] = x1

    out_ref[2 * ITER_NUM:2 * ITER_NUM + 1, :] = out0
    out_ref[2 * ITER_NUM + 1:2 * ITER_NUM + 2, :] = out1


# ---- glue (jitted so all layout plumbing fuses around the custom call) -------
@jax.jit
def memcenn_forward(x, a_weight, b_weight, init_mem):
    """x: (N, 1, 1, W_full) NCHW fp32. Returns (Output, States) like the torch module."""
    # TODO(synk): the torch forward's `print(x.shape)` side effect is omitted.
    x = x[:, :, :, 1:]                       # x = x[:, :, :, 1:]
    n, c, h, w = x.shape
    assert c == 1 and h == 1 and w == 2, "MeMCeNNLayer as written assumes C=1, H=1, W=2"

    # (W, N): batch on the lane axis.
    x_wn = jnp.transpose(x.reshape(n, w).astype(jnp.float32))
    mem_col = jnp.asarray(init_mem, jnp.float32).reshape(w, 1)
    slab = jnp.concatenate([x_wn, jnp.broadcast_to(mem_col, (w, n))], axis=0)   # (4, N)

    # 3x3 conv with H=1 & padding=1: only the middle kernel row touches data.
    # out[0] = row[1]*x0 + row[2]*x1 ; out[1] = row[0]*x0 + row[1]*x1
    a_row = jnp.asarray(a_weight, jnp.float32)[0, 0, 1, :]
    b_row = jnp.asarray(b_weight, jnp.float32)[0, 0, 1, :]
    params = jnp.stack([a_row[1], a_row[2], a_row[0],
                        b_row[1], b_row[2], b_row[0]]).astype(jnp.float32)      # f32[6]

    out_rows = (ITER_NUM + 1) * w
    slab_out = pl.pallas_call(
        memcenn_kernel,
        out_shape=jax.ShapeDtypeStruct((out_rows, n), jnp.float32),
        in_specs=[pl.BlockSpec(memory_space=pltpu.MemorySpace.SMEM),
                  pl.BlockSpec(memory_space=pltpu.MemorySpace.VMEM)],
        out_specs=pl.BlockSpec(memory_space=pltpu.MemorySpace.VMEM),
        cost_estimate=pl.CostEstimate(
            flops=ITER_NUM * 80 * w * n,
            transcendentals=0,
            bytes_accessed=(2 * w * n + 6 + out_rows * n) * 4),
    )(params, slab)

    states_wn = slab_out[: ITER_NUM * w].reshape(ITER_NUM, w, n)     # (S, W, N)
    output_wn = slab_out[ITER_NUM * w:]                              # (W, N)

    output = jnp.transpose(output_wn).reshape(n, 1, 1, w)
    # States in torch: (N, 1, 1, W, IterNum), filled with x after each step.
    states = jnp.transpose(states_wn, (2, 1, 0)).reshape(n, 1, 1, w, ITER_NUM)
    return output, states


# ---- pure-JAX reference (faithful to the torch code, conv via lax.conv) ------
def reference_forward(x, a_weight, b_weight, init_mem):
    x = x[:, :, :, 1:]

    def conv(inp, wgt):
        return jax.lax.conv_general_dilated(
            inp, wgt, (1, 1), ((1, 1), (1, 1)),
            dimension_numbers=("NCHW", "OIHW", "NCHW"),
            precision=jax.lax.Precision.HIGHEST)

    mem = jnp.asarray(init_mem, jnp.float32)
    input_coupling = conv(x, b_weight) + Z_CONST
    output = x
    states = []
    for _ in range(ITER_NUM):
        imem, mem = _memristive(x, mem)
        output = _leaky(x)
        coupling = conv(output, a_weight) + input_coupling - imem
        x = x + TIME_STEP * (-x + coupling)
        states.append(x)
    return output, jnp.stack(states, axis=-1)


if __name__ == "__main__":
    # Shapes implied by the module: batch 12 (the States buffer is 12x1x1x2xIterNum),
    # input (12, 1, 1, 3) NCHW; the forward slices off the first W column.
    N, C, H, W_FULL = 12, 1, 1, 3
    key = jax.random.PRNGKey(0)
    # Modest input range keeps the cubic/memristive Euler dynamics well
    # conditioned over 3 steps so the self-test tolerance can stay tight.
    x = jax.random.uniform(key, (N, C, H, W_FULL), jnp.float32, -0.5, 0.5)

    # Deterministic parameters, straight from the module's __init__.
    a_weight = jnp.asarray(
        [[[[-0.1176, 0.0788, -0.1068],
           [-0.7379, 1.1183, -0.8916],
           [0.1008, -0.1443, 0.1355]]]], jnp.float32)
    b_weight = jnp.asarray(
        [[[[0.0557, 0.1734, 0.2607],
           [-1.5312, 0.6234, -1.2246],
           [-0.2078, -0.2330, -0.0756]]]], jnp.float32)
    init_mem = jnp.asarray([0.4841, -0.0494], jnp.float32).reshape(1, 1, 1, 2)

    out, states = memcenn_forward(x, a_weight, b_weight, init_mem)
    jax.block_until_ready((out, states))

    assert out.shape == (N, 1, 1, 2)
    assert states.shape == (N, 1, 1, 2, ITER_NUM)

    ref_out, ref_states = reference_forward(x, a_weight, b_weight, init_mem)
    np.testing.assert_allclose(np.asarray(out), np.asarray(ref_out),
                               rtol=1e-4, atol=1e-4)
    np.testing.assert_allclose(np.asarray(states), np.asarray(ref_states),
                               rtol=1e-4, atol=1e-4)

    print("KERNEL_OK")
</pallas_src>

<mosaic_0001>
module attributes {stable_mosaic.version = 11 : i64} {
  func.func @memcenn_kernel(%arg0: memref<6xf32, #tpu.memory_space<smem>>, %arg1: memref<4x12xf32, #tpu.memory_space<vmem>>, %arg2: memref<8x12xf32, #tpu.memory_space<vmem>>) attributes {dimension_semantics = [], scalar_prefetch = 0 : i64, scratch_operands = 0 : i64, tpu.core_type = #tpu.core_type<tc>} {
    %c0 = arith.constant 0 : index
    %0 = memref.load %arg0[%c0] : memref<6xf32, #tpu.memory_space<smem>>
    %c1 = arith.constant 1 : index
    %1 = memref.load %arg0[%c1] : memref<6xf32, #tpu.memory_space<smem>>
    %c2 = arith.constant 2 : index
    %2 = memref.load %arg0[%c2] : memref<6xf32, #tpu.memory_space<smem>>
    %c3 = arith.constant 3 : index
    %3 = memref.load %arg0[%c3] : memref<6xf32, #tpu.memory_space<smem>>
    %c4 = arith.constant 4 : index
    %4 = memref.load %arg0[%c4] : memref<6xf32, #tpu.memory_space<smem>>
    %c5 = arith.constant 5 : index
    %5 = memref.load %arg0[%c5] : memref<6xf32, #tpu.memory_space<smem>>
    %c0_0 = arith.constant 0 : index
    %c0_1 = arith.constant 0 : index
    %6 = vector.load %arg1[%c0_0, %c0_1] : memref<4x12xf32, #tpu.memory_space<vmem>>, vector<1x12xf32>
    %c1_2 = arith.constant 1 : index
    %c0_3 = arith.constant 0 : index
    %7 = vector.load %arg1[%c1_2, %c0_3] : memref<4x12xf32, #tpu.memory_space<vmem>>, vector<1x12xf32>
    %c2_4 = arith.constant 2 : index
    %c0_5 = arith.constant 0 : index
    %8 = vector.load %arg1[%c2_4, %c0_5] : memref<4x12xf32, #tpu.memory_space<vmem>>, vector<1x12xf32>
    %c3_6 = arith.constant 3 : index
    %c0_7 = arith.constant 0 : index
    %9 = vector.load %arg1[%c3_6, %c0_7] : memref<4x12xf32, #tpu.memory_space<vmem>>, vector<1x12xf32>
    %10 = vector.broadcast %3 : f32 to vector<1x12xf32>
    %11 = arith.mulf %10, %6 : vector<1x12xf32>
    %12 = vector.broadcast %4 : f32 to vector<1x12xf32>
    %13 = arith.mulf %12, %7 : vector<1x12xf32>
    %14 = arith.addf %11, %13 : vector<1x12xf32>
    %cst = arith.constant -1.987500e+00 : f32
    %15 = vector.broadcast %cst : f32 to vector<1x12xf32>
    %16 = arith.addf %14, %15 : vector<1x12xf32>
    %17 = vector.broadcast %5 : f32 to vector<1x12xf32>
    %18 = arith.mulf %17, %6 : vector<1x12xf32>
    %19 = vector.broadcast %3 : f32 to vector<1x12xf32>
    %20 = arith.mulf %19, %7 : vector<1x12xf32>
    %21 = arith.addf %18, %20 : vector<1x12xf32>
    %cst_8 = arith.constant -1.987500e+00 : f32
    %22 = vector.broadcast %cst_8 : f32 to vector<1x12xf32>
    %23 = arith.addf %21, %22 : vector<1x12xf32>
    %cst_9 = arith.constant -6.280000e-01 : f32
    %24 = vector.broadcast %cst_9 : f32 to vector<1x12xf32>
    %25 = arith.mulf %24, %6 : vector<1x12xf32>
    %cst_10 = arith.constant -9.602000e-01 : f32
    %26 = vector.broadcast %cst_10 : f32 to vector<1x12xf32>
    %27 = arith.addf %26, %25 : vector<1x12xf32>
    %cst_11 = arith.constant -2.183100e+00 : f32
    %28 = vector.broadcast %cst_11 : f32 to vector<1x12xf32>
    %29 = arith.mulf %28, %6 : vector<1x12xf32>
    %30 = arith.mulf %29, %6 : vector<1x12xf32>
    %31 = arith.addf %27, %30 : vector<1x12xf32>
    %cst_12 = arith.constant 1.535900e+00 : f32
    %32 = vector.broadcast %cst_12 : f32 to vector<1x12xf32>
    %33 = arith.mulf %32, %6 : vector<1x12xf32>
    %34 = arith.mulf %33, %6 : vector<1x12xf32>
    %35 = arith.mulf %34, %6 : vector<1x12xf32>
    %36 = arith.addf %31, %35 : vector<1x12xf32>
    %cst_13 = arith.constant 1.668600e+00 : f32
    %37 = vector.broadcast %cst_13 : f32 to vector<1x12xf32>
    %38 = arith.mulf %37, %8 : vector<1x12xf32>
    %cst_14 = arith.constant 1.236300e+00 : f32
    %39 = vector.broadcast %cst_14 : f32 to vector<1x12xf32>
    %40 = arith.mulf %39, %8 : vector<1x12xf32>
    %41 = arith.mulf %40, %8 : vector<1x12xf32>
    %42 = arith.addf %38, %41 : vector<1x12xf32>
    %cst_15 = arith.constant -1.150900e+00 : f32
    %43 = vector.broadcast %cst_15 : f32 to vector<1x12xf32>
    %44 = arith.mulf %43, %8 : vector<1x12xf32>
    %45 = arith.mulf %44, %8 : vector<1x12xf32>
    %46 = arith.mulf %45, %8 : vector<1x12xf32>
    %47 = arith.addf %42, %46 : vector<1x12xf32>
    %cst_16 = arith.constant 5.227000e-01 : f32
    %48 = vector.broadcast %cst_16 : f32 to vector<1x12xf32>
    %49 = arith.mulf %48, %6 : vector<1x12xf32>
    %50 = arith.mulf %49, %8 : vector<1x12xf32>
    %cst_17 = arith.constant -1.854300e+00 : f32
    %51 = vector.broadcast %cst_17 : f32 to vector<1x12xf32>
    %52 = arith.mulf %51, %6 : vector<1x12xf32>
    %53 = arith.mulf %52, %8 : vector<1x12xf32>
    %54 = arith.mulf %53, %8 : vector<1x12xf32>
    %55 = arith.addf %50, %54 : vector<1x12xf32>
    %cst_18 = arith.constant -4.500000e-02 : f32
    %56 = vector.broadcast %cst_18 : f32 to vector<1x12xf32>
    %57 = arith.mulf %56, %6 : vector<1x12xf32>
    %58 = arith.mulf %57, %6 : vector<1x12xf32>
    %59 = arith.mulf %58, %8 : vector<1x12xf32>
    %60 = arith.addf %55, %59 : vector<1x12xf32>
    %61 = arith.addf %36, %47 : vector<1x12xf32>
    %62 = arith.addf %61, %60 : vector<1x12xf32>
    %cst_19 = arith.constant 3.000000e-01 : f32
    %63 = vector.broadcast %cst_19 : f32 to vector<1x12xf32>
    %64 = arith.mulf %63, %62 : vector<1x12xf32>
    %65 = arith.addf %8, %64 : vector<1x12xf32>
    %cst_20 = arith.constant -1.290300e+00 : f32
    %66 = vector.broadcast %cst_20 : f32 to vector<1x12xf32>
    %67 = arith.mulf %66, %6 : vector<1x12xf32>
    %cst_21 = arith.constant -1.204000e+00 : f32
    %68 = vector.broadcast %cst_21 : f32 to vector<1x12xf32>
    %69 = arith.addf %68, %67 : vector<1x12xf32>
    %cst_22 = arith.constant -1.515800e+00 : f32
    %70 = vector.broadcast %cst_22 : f32 to vector<1x12xf32>
    %71 = arith.mulf %70, %6 : vector<1x12xf32>
    %72 = arith.mulf %71, %6 : vector<1x12xf32>
    %73 = arith.addf %69, %72 : vector<1x12xf32>
    %cst_23 = arith.constant -2.210000e-01 : f32
    %74 = vector.broadcast %cst_23 : f32 to vector<1x12xf32>
    %75 = arith.mulf %74, %6 : vector<1x12xf32>
    %76 = arith.mulf %75, %6 : vector<1x12xf32>
    %77 = arith.mulf %76, %6 : vector<1x12xf32>
    %78 = arith.addf %73, %77 : vector<1x12xf32>
    %cst_24 = arith.constant 0.648899972 : f32
    %79 = vector.broadcast %cst_24 : f32 to vector<1x12xf32>
    %80 = arith.mulf %79, %65 : vector<1x12xf32>
    %cst_25 = arith.constant 8.607000e-01 : f32
    %81 = vector.broadcast %cst_25 : f32 to vector<1x12xf32>
    %82 = arith.mulf %81, %65 : vector<1x12xf32>
    %83 = arith.mulf %82, %65 : vector<1x12xf32>
    %84 = arith.addf %80, %83 : vector<1x12xf32>
    %cst_26 = arith.constant -0.844399988 : f32
    %85 = vector.broadcast %cst_26 : f32 to vector<1x12xf32>
    %86 = arith.mulf %85, %65 : vector<1x12xf32>
    %87 = arith.mulf %86, %65 : vector<1x12xf32>
    %88 = arith.mulf %87, %65 : vector<1x12xf32>
    %89 = arith.addf %84, %88 : vector<1x12xf32>
    %cst_27 = arith.constant 2.612000e-01 : f32
    %90 = vector.broadcast %cst_27 : f32 to vector<1x12xf32>
    %91 = arith.mulf %90, %6 : vector<1x12xf32>
    %92 = arith.mulf %91, %65 : vector<1x12xf32>
    %cst_28 = arith.constant -4.397000e-01 : f32
    %93 = vector.broadcast %cst_28 : f32 to vector<1x12xf32>
    %94 = arith.mulf %93, %6 : vector<1x12xf32>
    %95 = arith.mulf %94, %65 : vector<1x12xf32>
    %96 = arith.mulf %95, %65 : vector<1x12xf32>
    %97 = arith.addf %92, %96 : vector<1x12xf32>
    %cst_29 = arith.constant 1.084200e+00 : f32
    %98 = vector.broadcast %cst_29 : f32 to vector<1x12xf32>
    %99 = arith.mulf %98, %6 : vector<1x12xf32>
    %100 = arith.mulf %99, %6 : vector<1x12xf32>
    %101 = arith.mulf %100, %65 : vector<1x12xf32>
    %102 = arith.addf %97, %101 : vector<1x12xf32>
    %103 = arith.addf %78, %89 : vector<1x12xf32>
    %104 = arith.addf %103, %102 : vector<1x12xf32>
    %105 = arith.mulf %6, %104 : vector<1x12xf32>
    %cst_30 = arith.constant -6.280000e-01 : f32
    %106 = vector.broadcast %cst_30 : f32 to vector<1x12xf32>
    %107 = arith.mulf %106, %7 : vector<1x12xf32>
    %cst_31 = arith.constant -9.602000e-01 : f32
    %108 = vector.broadcast %cst_31 : f32 to vector<1x12xf32>
    %109 = arith.addf %108, %107 : vector<1x12xf32>
    %cst_32 = arith.constant -2.183100e+00 : f32
    %110 = vector.broadcast %cst_32 : f32 to vector<1x12xf32>
    %111 = arith.mulf %110, %7 : vector<1x12xf32>
    %112 = arith.mulf %111, %7 : vector<1x12xf32>
    %113 = arith.addf %109, %112 : vector<1x12xf32>
    %cst_33 = arith.constant 1.535900e+00 : f32
    %114 = vector.broadcast %cst_33 : f32 to vector<1x12xf32>
    %115 = arith.mulf %114, %7 : vector<1x12xf32>
    %116 = arith.mulf %115, %7 : vector<1x12xf32>
    %117 = arith.mulf %116, %7 : vector<1x12xf32>
    %118 = arith.addf %113, %117 : vector<1x12xf32>
    %cst_34 = arith.constant 1.668600e+00 : f32
    %119 = vector.broadcast %cst_34 : f32 to vector<1x12xf32>
    %120 = arith.mulf %119, %9 : vector<1x12xf32>
    %cst_35 = arith.constant 1.236300e+00 : f32
    %121 = vector.broadcast %cst_35 : f32 to vector<1x12xf32>
    %122 = arith.mulf %121, %9 : vector<1x12xf32>
    %123 = arith.mulf %122, %9 : vector<1x12xf32>
    %124 = arith.addf %120, %123 : vector<1x12xf32>
    %cst_36 = arith.constant -1.150900e+00 : f32
    %125 = vector.broadcast %cst_36 : f32 to vector<1x12xf32>
    %126 = arith.mulf %125, %9 : vector<1x12xf32>
    %127 = arith.mulf %126, %9 : vector<1x12xf32>
    %128 = arith.mulf %127, %9 : vector<1x12xf32>
    %129 = arith.addf %124, %128 : vector<1x12xf32>
    %cst_37 = arith.constant 5.227000e-01 : f32
    %130 = vector.broadcast %cst_37 : f32 to vector<1x12xf32>
    %131 = arith.mulf %130, %7 : vector<1x12xf32>
    %132 = arith.mulf %131, %9 : vector<1x12xf32>
    %cst_38 = arith.constant -1.854300e+00 : f32
    %133 = vector.broadcast %cst_38 : f32 to vector<1x12xf32>
    %134 = arith.mulf %133, %7 : vector<1x12xf32>
    %135 = arith.mulf %134, %9 : vector<1x12xf32>
    %136 = arith.mulf %135, %9 : vector<1x12xf32>
    %137 = arith.addf %132, %136 : vector<1x12xf32>
    %cst_39 = arith.constant -4.500000e-02 : f32
    %138 = vector.broadcast %cst_39 : f32 to vector<1x12xf32>
    %139 = arith.mulf %138, %7 : vector<1x12xf32>
    %140 = arith.mulf %139, %7 : vector<1x12xf32>
    %141 = arith.mulf %140, %9 : vector<1x12xf32>
    %142 = arith.addf %137, %141 : vector<1x12xf32>
    %143 = arith.addf %118, %129 : vector<1x12xf32>
    %144 = arith.addf %143, %142 : vector<1x12xf32>
    %cst_40 = arith.constant 3.000000e-01 : f32
    %145 = vector.broadcast %cst_40 : f32 to vector<1x12xf32>
    %146 = arith.mulf %145, %144 : vector<1x12xf32>
    %147 = arith.addf %9, %146 : vector<1x12xf32>
    %cst_41 = arith.constant -1.290300e+00 : f32
    %148 = vector.broadcast %cst_41 : f32 to vector<1x12xf32>
    %149 = arith.mulf %148, %7 : vector<1x12xf32>
    %cst_42 = arith.constant -1.204000e+00 : f32
    %150 = vector.broadcast %cst_42 : f32 to vector<1x12xf32>
    %151 = arith.addf %150, %149 : vector<1x12xf32>
    %cst_43 = arith.constant -1.515800e+00 : f32
    %152 = vector.broadcast %cst_43 : f32 to vector<1x12xf32>
    %153 = arith.mulf %152, %7 : vector<1x12xf32>
    %154 = arith.mulf %153, %7 : vector<1x12xf32>
    %155 = arith.addf %151, %154 : vector<1x12xf32>
    %cst_44 = arith.constant -2.210000e-01 : f32
    %156 = vector.broadcast %cst_44 : f32 to vector<1x12xf32>
    %157 = arith.mulf %156, %7 : vector<1x12xf32>
    %158 = arith.mulf %157, %7 : vector<1x12xf32>
    %159 = arith.mulf %158, %7 : vector<1x12xf32>
    %160 = arith.addf %155, %159 : vector<1x12xf32>
    %cst_45 = arith.constant 0.648899972 : f32
    %161 = vector.broadcast %cst_45 : f32 to vector<1x12xf32>
    %162 = arith.mulf %161, %147 : vector<1x12xf32>
    %cst_46 = arith.constant 8.607000e-01 : f32
    %163 = vector.broadcast %cst_46 : f32 to vector<1x12xf32>
    %164 = arith.mulf %163, %147 : vector<1x12xf32>
    %165 = arith.mulf %164, %147 : vector<1x12xf32>
    %166 = arith.addf %162, %165 : vector<1x12xf32>
    %cst_47 = arith.constant -0.844399988 : f32
    %167 = vector.broadcast %cst_47 : f32 to vector<1x12xf32>
    %168 = arith.mulf %167, %147 : vector<1x12xf32>
    %169 = arith.mulf %168, %147 : vector<1x12xf32>
    %170 = arith.mulf %169, %147 : vector<1x12xf32>
    %171 = arith.addf %166, %170 : vector<1x12xf32>
    %cst_48 = arith.constant 2.612000e-01 : f32
    %172 = vector.broadcast %cst_48 : f32 to vector<1x12xf32>
    %173 = arith.mulf %172, %7 : vector<1x12xf32>
    %174 = arith.mulf %173, %147 : vector<1x12xf32>
    %cst_49 = arith.constant -4.397000e-01 : f32
    %175 = vector.broadcast %cst_49 : f32 to vector<1x12xf32>
    %176 = arith.mulf %175, %7 : vector<1x12xf32>
    %177 = arith.mulf %176, %147 : vector<1x12xf32>
    %178 = arith.mulf %177, %147 : vector<1x12xf32>
    %179 = arith.addf %174, %178 : vector<1x12xf32>
    %cst_50 = arith.constant 1.084200e+00 : f32
    %180 = vector.broadcast %cst_50 : f32 to vector<1x12xf32>
    %181 = arith.mulf %180, %7 : vector<1x12xf32>
    %182 = arith.mulf %181, %7 : vector<1x12xf32>
    %183 = arith.mulf %182, %147 : vector<1x12xf32>
    %184 = arith.addf %179, %183 : vector<1x12xf32>
    %185 = arith.addf %160, %171 : vector<1x12xf32>
    %186 = arith.addf %185, %184 : vector<1x12xf32>
    %187 = arith.mulf %7, %186 : vector<1x12xf32>
    %cst_51 = arith.constant 1.000000e+00 : f32
    %188 = vector.broadcast %cst_51 : f32 to vector<1x12xf32>
    %189 = arith.subf %6, %188 : vector<1x12xf32>
    %cst_52 = arith.constant 0.00999999977 : f32
    %190 = vector.broadcast %cst_52 : f32 to vector<1x12xf32>
    %191 = arith.mulf %190, %189 : vector<1x12xf32>
    %cst_53 = arith.constant 1.000000e+00 : f32
    %192 = vector.broadcast %cst_53 : f32 to vector<1x12xf32>
    %193 = arith.addf %192, %191 : vector<1x12xf32>
    %194 = arith.minimumf %6, %193 : vector<1x12xf32>
    %cst_54 = arith.constant 1.000000e+00 : f32
    %195 = vector.broadcast %cst_54 : f32 to vector<1x12xf32>
    %196 = arith.addf %194, %195 : vector<1x12xf32>
    %cst_55 = arith.constant 0.00999999977 : f32
    %197 = vector.broadcast %cst_55 : f32 to vector<1x12xf32>
    %198 = arith.mulf %197, %196 : vector<1x12xf32>
    %cst_56 = arith.constant -1.000000e+00 : f32
    %199 = vector.broadcast %cst_56 : f32 to vector<1x12xf32>
    %200 = arith.addf %199, %198 : vector<1x12xf32>
    %201 = arith.maximumf %194, %200 : vector<1x12xf32>
    %cst_57 = arith.constant 1.000000e+00 : f32
    %202 = vector.broadcast %cst_57 : f32 to vector<1x12xf32>
    %203 = arith.subf %7, %202 : vector<1x12xf32>
    %cst_58 = arith.constant 0.00999999977 : f32
    %204 = vector.broadcast %cst_58 : f32 to vector<1x12xf32>
    %205 = arith.mulf %204, %203 : vector<1x12xf32>
    %cst_59 = arith.constant 1.000000e+00 : f32
    %206 = vector.broadcast %cst_59 : f32 to vector<1x12xf32>
    %207 = arith.addf %206, %205 : vector<1x12xf32>
    %208 = arith.minimumf %7, %207 : vector<1x12xf32>
    %cst_60 = arith.constant 1.000000e+00 : f32
    %209 = vector.broadcast %cst_60 : f32 to vector<1x12xf32>
    %210 = arith.addf %208, %209 : vector<1x12xf32>
    %cst_61 = arith.constant 0.00999999977 : f32
    %211 = vector.broadcast %cst_61 : f32 to vector<1x12xf32>
    %212 = arith.mulf %211, %210 : vector<1x12xf32>
    %cst_62 = arith.constant -1.000000e+00 : f32
    %213 = vector.broadcast %cst_62 : f32 to vector<1x12xf32>
    %214 = arith.addf %213, %212 : vector<1x12xf32>
    %215 = arith.maximumf %208, %214 : vector<1x12xf32>
    %216 = vector.broadcast %0 : f32 to vector<1x12xf32>
    %217 = arith.mulf %216, %201 : vector<1x12xf32>
    %218 = vector.broadcast %1 : f32 to vector<1x12xf32>
    %219 = arith.mulf %218, %215 : vector<1x12xf32>
    %220 = arith.addf %217, %219 : vector<1x12xf32>
    %221 = arith.addf %220, %16 : vector<1x12xf32>
    %222 = arith.subf %221, %105 : vector<1x12xf32>
    %223 = vector.broadcast %2 : f32 to vector<1x12xf32>
    %224 = arith.mulf %223, %201 : vector<1x12xf32>
    %225 = vector.broadcast %0 : f32 to vector<1x12xf32>
    %226 = arith.mulf %225, %215 : vector<1x12xf32>
    %227 = arith.addf %224, %226 : vector<1x12xf32>
    %228 = arith.addf %227, %23 : vector<1x12xf32>
    %229 = arith.subf %228, %187 : vector<1x12xf32>
    %cst_63 = arith.constant 0.000000e+00 : f32
    %230 = vector.broadcast %cst_63 : f32 to vector<1x12xf32>
    %231 = arith.subf %230, %6 : vector<1x12xf32>
    %232 = arith.addf %231, %222 : vector<1x12xf32>
    %cst_64 = arith.constant 3.000000e-01 : f32
    %233 = vector.broadcast %cst_64 : f32 to vector<1x12xf32>
    %234 = arith.mulf %233, %232 : vector<1x12xf32>
    %235 = arith.addf %6, %234 : vector<1x12xf32>
    %cst_65 = arith.constant 0.000000e+00 : f32
    %236 = vector.broadcast %cst_65 : f32 to vector<1x12xf32>
    %237 = arith.subf %236, %7 : vector<1x12xf32>
    %238 = arith.addf %237, %229 : vector<1x12xf32>
    %cst_66 = arith.constant 3.000000e-01 : f32
    %239 = vector.broadcast %cst_66 : f32 to vector<1x12xf32>
    %240 = arith.mulf %239, %238 : vector<1x12xf32>
    %241 = arith.addf %7, %240 : vector<1x12xf32>
    %c0_67 = arith.constant 0 : index
    %c0_68 = arith.constant 0 : index
    %242 = vector.load %arg2[%c0_67, %c0_68] : memref<8x12xf32, #tpu.memory_space<vmem>>, vector<1x12xf32>
    tpu.vector_store %arg2[%c0_67, %c0_68], %235 {strides = array<i32>} : memref<8x12xf32, #tpu.memory_space<vmem>>, vector<1x12xf32>,
    %c1_69 = arith.constant 1 : index
    %c0_70 = arith.constant 0 : index
    %243 = vector.load %arg2[%c1_69, %c0_70] : memref<8x12xf32, #tpu.memory_space<vmem>>, vector<1x12xf32>
    tpu.vector_store %arg2[%c1_69, %c0_70], %241 {strides = array<i32>} : memref<8x12xf32, #tpu.memory_space<vmem>>, vector<1x12xf32>,
    %cst_71 = arith.constant -6.280000e-01 : f32
    %244 = vector.broadcast %cst_71 : f32 to vector<1x12xf32>
    %245 = arith.mulf %244, %235 : vector<1x12xf32>
    %cst_72 = arith.constant -9.602000e-01 : f32
    %246 = vector.broadcast %cst_72 : f32 to vector<1x12xf32>
    %247 = arith.addf %246, %245 : vector<1x12xf32>
    %cst_73 = arith.constant -2.183100e+00 : f32
    %248 = vector.broadcast %cst_73 : f32 to vector<1x12xf32>
    %249 = arith.mulf %248, %235 : vector<1x12xf32>
    %250 = arith.mulf %249, %235 : vector<1x12xf32>
    %251 = arith.addf %247, %250 : vector<1x12xf32>
    %cst_74 = arith.constant 1.535900e+00 : f32
    %252 = vector.broadcast %cst_74 : f32 to vector<1x12xf32>
    %253 = arith.mulf %252, %235 : vector<1x12xf32>
    %254 = arith.mulf %253, %235 : vector<1x12xf32>
    %255 = arith.mulf %254, %235 : vector<1x12xf32>
    %256 = arith.addf %251, %255 : vector<1x12xf32>
    %cst_75 = arith.constant 1.668600e+00 : f32
    %257 = vector.broadcast %cst_75 : f32 to vector<1x12xf32>
    %258 = arith.mulf %257, %65 : vector<1x12xf32>
    %cst_76 = arith.constant 1.236300e+00 : f32
    %259 = vector.broadcast %cst_76 : f32 to vector<1x12xf32>
    %260 = arith.mulf %259, %65 : vector<1x12xf32>
    %261 = arith.mulf %260, %65 : vector<1x12xf32>
    %262 = arith.addf %258, %261 : vector<1x12xf32>
    %cst_77 = arith.constant -1.150900e+00 : f32
    %263 = vector.broadcast %cst_77 : f32 to vector<1x12xf32>
    %264 = arith.mulf %263, %65 : vector<1x12xf32>
    %265 = arith.mulf %264, %65 : vector<1x12xf32>
    %266 = arith.mulf %265, %65 : vector<1x12xf32>
    %267 = arith.addf %262, %266 : vector<1x12xf32>
    %cst_78 = arith.constant 5.227000e-01 : f32
    %268 = vector.broadcast %cst_78 : f32 to vector<1x12xf32>
    %269 = arith.mulf %268, %235 : vector<1x12xf32>
    %270 = arith.mulf %269, %65 : vector<1x12xf32>
    %cst_79 = arith.constant -1.854300e+00 : f32
    %271 = vector.broadcast %cst_79 : f32 to vector<1x12xf32>
    %272 = arith.mulf %271, %235 : vector<1x12xf32>
    %273 = arith.mulf %272, %65 : vector<1x12xf32>
    %274 = arith.mulf %273, %65 : vector<1x12xf32>
    %275 = arith.addf %270, %274 : vector<1x12xf32>
    %cst_80 = arith.constant -4.500000e-02 : f32
    %276 = vector.broadcast %cst_80 : f32 to vector<1x12xf32>
    %277 = arith.mulf %276, %235 : vector<1x12xf32>
    %278 = arith.mulf %277, %235 : vector<1x12xf32>
    %279 = arith.mulf %278, %65 : vector<1x12xf32>
    %280 = arith.addf %275, %279 : vector<1x12xf32>
    %281 = arith.addf %256, %267 : vector<1x12xf32>
    %282 = arith.addf %281, %280 : vector<1x12xf32>
    %cst_81 = arith.constant 3.000000e-01 : f32
    %283 = vector.broadcast %cst_81 : f32 to vector<1x12xf32>
    %284 = arith.mulf %283, %282 : vector<1x12xf32>
    %285 = arith.addf %65, %284 : vector<1x12xf32>
    %cst_82 = arith.constant -1.290300e+00 : f32
    %286 = vector.broadcast %cst_82 : f32 to vector<1x12xf32>
    %287 = arith.mulf %286, %235 : vector<1x12xf32>
    %cst_83 = arith.constant -1.204000e+00 : f32
    %288 = vector.broadcast %cst_83 : f32 to vector<1x12xf32>
    %289 = arith.addf %288, %287 : vector<1x12xf32>
    %cst_84 = arith.constant -1.515800e+00 : f32
    %290 = vector.broadcast %cst_84 : f32 to vector<1x12xf32>
    %291 = arith.mulf %290, %235 : vector<1x12xf32>
    %292 = arith.mulf %291, %235 : vector<1x12xf32>
    %293 = arith.addf %289, %292 : vector<1x12xf32>
    %cst_85 = arith.constant -2.210000e-01 : f32
    %294 = vector.broadcast %cst_85 : f32 to vector<1x12xf32>
    %295 = arith.mulf %294, %235 : vector<1x12xf32>
    %296 = arith.mulf %295, %235 : vector<1x12xf32>
    %297 = arith.mulf %296, %235 : vector<1x12xf32>
    %298 = arith.addf %293, %297 : vector<1x12xf32>
    %cst_86 = arith.constant 0.648899972 : f32
    %299 = vector.broadcast %cst_86 : f32 to vector<1x12xf32>
    %300 = arith.mulf %299, %285 : vector<1x12xf32>
    %cst_87 = arith.constant 8.607000e-01 : f32
    %301 = vector.broadcast %cst_87 : f32 to vector<1x12xf32>
    %302 = arith.mulf %301, %285 : vector<1x12xf32>
    %303 = arith.mulf %302, %285 : vector<1x12xf32>
    %304 = arith.addf %300, %303 : vector<1x12xf32>
    %cst_88 = arith.constant -0.844399988 : f32
    %305 = vector.broadcast %cst_88 : f32 to vector<1x12xf32>
    %306 = arith.mulf %305, %285 : vector<1x12xf32>
    %307 = arith.mulf %306, %285 : vector<1x12xf32>
    %308 = arith.mulf %307, %285 : vector<1x12xf32>
    %309 = arith.addf %304, %308 : vector<1x12xf32>
    %cst_89 = arith.constant 2.612000e-01 : f32
    %310 = vector.broadcast %cst_89 : f32 to vector<1x12xf32>
    %311 = arith.mulf %310, %235 : vector<1x12xf32>
    %312 = arith.mulf %311, %285 : vector<1x12xf32>
    %cst_90 = arith.constant -4.397000e-01 : f32
    %313 = vector.broadcast %cst_90 : f32 to vector<1x12xf32>
    %314 = arith.mulf %313, %235 : vector<1x12xf32>
    %315 = arith.mulf %314, %285 : vector<1x12xf32>
    %316 = arith.mulf %315, %285 : vector<1x12xf32>
    %317 = arith.addf %312, %316 : vector<1x12xf32>
    %cst_91 = arith.constant 1.084200e+00 : f32
    %318 = vector.broadcast %cst_91 : f32 to vector<1x12xf32>
    %319 = arith.mulf %318, %235 : vector<1x12xf32>
    %320 = arith.mulf %319, %235 : vector<1x12xf32>
    %321 = arith.mulf %320, %285 : vector<1x12xf32>
    %322 = arith.addf %317, %321 : vector<1x12xf32>
    %323 = arith.addf %298, %309 : vector<1x12xf32>
    %324 = arith.addf %323, %322 : vector<1x12xf32>
    %325 = arith.mulf %235, %324 : vector<1x12xf32>
    %cst_92 = arith.constant -6.280000e-01 : f32
    %326 = vector.broadcast %cst_92 : f32 to vector<1x12xf32>
    %327 = arith.mulf %326, %241 : vector<1x12xf32>
    %cst_93 = arith.constant -9.602000e-01 : f32
    %328 = vector.broadcast %cst_93 : f32 to vector<1x12xf32>
    %329 = arith.addf %328, %327 : vector<1x12xf32>
    %cst_94 = arith.constant -2.183100e+00 : f32
    %330 = vector.broadcast %cst_94 : f32 to vector<1x12xf32>
    %331 = arith.mulf %330, %241 : vector<1x12xf32>
    %332 = arith.mulf %331, %241 : vector<1x12xf32>
    %333 = arith.addf %329, %332 : vector<1x12xf32>
    %cst_95 = arith.constant 1.535900e+00 : f32
    %334 = vector.broadcast %cst_95 : f32 to vector<1x12xf32>
    %335 = arith.mulf %334, %241 : vector<1x12xf32>
    %336 = arith.mulf %335, %241 : vector<1x12xf32>
    %337 = arith.mulf %336, %241 : vector<1x12xf32>
    %338 = arith.addf %333, %337 : vector<1x12xf32>
    %cst_96 = arith.constant 1.668600e+00 : f32
    %339 = vector.broadcast %cst_96 : f32 to vector<1x12xf32>
    %340 = arith.mulf %339, %147 : vector<1x12xf32>
    %cst_97 = arith.constant 1.236300e+00 : f32
    %341 = vector.broadcast %cst_97 : f32 to vector<1x12xf32>
    %342 = arith.mulf %341, %147 : vector<1x12xf32>
    %343 = arith.mulf %342, %147 : vector<1x12xf32>
    %344 = arith.addf %340, %343 : vector<1x12xf32>
    %cst_98 = arith.constant -1.150900e+00 : f32
    %345 = vector.broadcast %cst_98 : f32 to vector<1x12xf32>
    %346 = arith.mulf %345, %147 : vector<1x12xf32>
    %347 = arith.mulf %346, %147 : vector<1x12xf32>
    %348 = arith.mulf %347, %147 : vector<1x12xf32>
    %349 = arith.addf %344, %348 : vector<1x12xf32>
    %cst_99 = arith.constant 5.227000e-01 : f32
    %350 = vector.broadcast %cst_99 : f32 to vector<1x12xf32>
    %351 = arith.mulf %350, %241 : vector<1x12xf32>
    %352 = arith.mulf %351, %147 : vector<1x12xf32>
    %cst_100 = arith.constant -1.854300e+00 : f32
    %353 = vector.broadcast %cst_100 : f32 to vector<1x12xf32>
    %354 = arith.mulf %353, %241 : vector<1x12xf32>
    %355 = arith.mulf %354, %147 : vector<1x12xf32>
    %356 = arith.mulf %355, %147 : vector<1x12xf32>
    %357 = arith.addf %352, %356 : vector<1x12xf32>
    %cst_101 = arith.constant -4.500000e-02 : f32
    %358 = vector.broadcast %cst_101 : f32 to vector<1x12xf32>
    %359 = arith.mulf %358, %241 : vector<1x12xf32>
    %360 = arith.mulf %359, %241 : vector<1x12xf32>
    %361 = arith.mulf %360, %147 : vector<1x12xf32>
    %362 = arith.addf %357, %361 : vector<1x12xf32>
    %363 = arith.addf %338, %349 : vector<1x12xf32>
    %364 = arith.addf %363, %362 : vector<1x12xf32>
    %cst_102 = arith.constant 3.000000e-01 : f32
    %365 = vector.broadcast %cst_102 : f32 to vector<1x12xf32>
    %366 = arith.mulf %365, %364 : vector<1x12xf32>
    %367 = arith.addf %147, %366 : vector<1x12xf32>
    %cst_103 = arith.constant -1.290300e+00 : f32
    %368 = vector.broadcast %cst_103 : f32 to vector<1x12xf32>
    %369 = arith.mulf %368, %241 : vector<1x12xf32>
    %cst_104 = arith.constant -1.204000e+00 : f32
    %370 = vector.broadcast %cst_104 : f32 to vector<1x12xf32>
    %371 = arith.addf %370, %369 : vector<1x12xf32>
    %cst_105 = arith.constant -1.515800e+00 : f32
    %372 = vector.broadcast %cst_105 : f32 to vector<1x12xf32>
    %373 = arith.mulf %372, %241 : vector<1x12xf32>
    %374 = arith.mulf %373, %241 : vector<1x12xf32>
    %375 = arith.addf %371, %374 : vector<1x12xf32>
    %cst_106 = arith.constant -2.210000e-01 : f32
    %376 = vector.broadcast %cst_106 : f32 to vector<1x12xf32>
    %377 = arith.mulf %376, %241 : vector<1x12xf32>
    %378 = arith.mulf %377, %241 : vector<1x12xf32>
    %379 = arith.mulf %378, %241 : vector<1x12xf32>
    %380 = arith.addf %375, %379 : vector<1x12xf32>
    %cst_107 = arith.constant 0.648899972 : f32
    %381 = vector.broadcast %cst_107 : f32 to vector<1x12xf32>
    %382 = arith.mulf %381, %367 : vector<1x12xf32>
    %cst_108 = arith.constant 8.607000e-01 : f32
    %383 = vector.broadcast %cst_108 : f32 to vector<1x12xf32>
    %384 = arith.mulf %383, %367 : vector<1x12xf32>
    %385 = arith.mulf %384, %367 : vector<1x12xf32>
    %386 = arith.addf %382, %385 : vector<1x12xf32>
    %cst_109 = arith.constant -0.844399988 : f32
    %387 = vector.broadcast %cst_109 : f32 to vector<1x12xf32>
    %388 = arith.mulf %387, %367 : vector<1x12xf32>
    %389 = arith.mulf %388, %367 : vector<1x12xf32>
    %390 = arith.mulf %389, %367 : vector<1x12xf32>
    %391 = arith.addf %386, %390 : vector<1x12xf32>
    %cst_110 = arith.constant 2.612000e-01 : f32
    %392 = vector.broadcast %cst_110 : f32 to vector<1x12xf32>
    %393 = arith.mulf %392, %241 : vector<1x12xf32>
    %394 = arith.mulf %393, %367 : vector<1x12xf32>
    %cst_111 = arith.constant -4.397000e-01 : f32
    %395 = vector.broadcast %cst_111 : f32 to vector<1x12xf32>
    %396 = arith.mulf %395, %241 : vector<1x12xf32>
    %397 = arith.mulf %396, %367 : vector<1x12xf32>
    %398 = arith.mulf %397, %367 : vector<1x12xf32>
    %399 = arith.addf %394, %398 : vector<1x12xf32>
    %cst_112 = arith.constant 1.084200e+00 : f32
    %400 = vector.broadcast %cst_112 : f32 to vector<1x12xf32>
    %401 = arith.mulf %400, %241 : vector<1x12xf32>
    %402 = arith.mulf %401, %241 : vector<1x12xf32>
    %403 = arith.mulf %402, %367 : vector<1x12xf32>
    %404 = arith.addf %399, %403 : vector<1x12xf32>
    %405 = arith.addf %380, %391 : vector<1x12xf32>
    %406 = arith.addf %405, %404 : vector<1x12xf32>
    %407 = arith.mulf %241, %406 : vector<1x12xf32>
    %cst_113 = arith.constant 1.000000e+00 : f32
    %408 = vector.broadcast %cst_113 : f32 to vector<1x12xf32>
    %409 = arith.subf %235, %408 : vector<1x12xf32>
    %cst_114 = arith.constant 0.00999999977 : f32
    %410 = vector.broadcast %cst_114 : f32 to vector<1x12xf32>
    %411 = arith.mulf %410, %409 : vector<1x12xf32>
    %cst_115 = arith.constant 1.000000e+00 : f32
    %412 = vector.broadcast %cst_115 : f32 to vector<1x12xf32>
    %413 = arith.addf %412, %411 : vector<1x12xf32>
    %414 = arith.minimumf %235, %413 : vector<1x12xf32>
    %cst_116 = arith.constant 1.000000e+00 : f32
    %415 = vector.broadcast %cst_116 : f32 to vector<1x12xf32>
    %416 = arith.addf %414, %415 : vector<1x12xf32>
    %cst_117 = arith.constant 0.00999999977 : f32
    %417 = vector.broadcast %cst_117 : f32 to vector<1x12xf32>
    %418 = arith.mulf %417, %416 : vector<1x12xf32>
    %cst_118 = arith.constant -1.000000e+00 : f32
    %419 = vector.broadcast %cst_118 : f32 to vector<1x12xf32>
    %420 = arith.addf %419, %418 : vector<1x12xf32>
    %421 = arith.maximumf %414, %420 : vector<1x12xf32>
    %cst_119 = arith.constant 1.000000e+00 : f32
    %422 = vector.broadcast %cst_119 : f32 to vector<1x12xf32>
    %423 = arith.subf %241, %422 : vector<1x12xf32>
    %cst_120 = arith.constant 0.00999999977 : f32
    %424 = vector.broadcast %cst_120 : f32 to vector<1x12xf32>
    %425 = arith.mulf %424, %423 : vector<1x12xf32>
    %cst_121 = arith.constant 1.000000e+00 : f32
    %426 = vector.broadcast %cst_121 : f32 to vector<1x12xf32>
    %427 = arith.addf %426, %425 : vector<1x12xf32>
    %428 = arith.minimumf %241, %427 : vector<1x12xf32>
    %cst_122 = arith.constant 1.000000e+00 : f32
    %429 = vector.broadcast %cst_122 : f32 to vector<1x12xf32>
    %430 = arith.addf %428, %429 : vector<1x12xf32>
    %cst_123 = arith.constant 0.00999999977 : f32
    %431 = vector.broadcast %cst_123 : f32 to vector<1x12xf32>
    %432 = arith.mulf %431, %430 : vector<1x12xf32>
    %cst_124 = arith.constant -1.000000e+00 : f32
    %433 = vector.broadcast %cst_124 : f32 to vector<1x12xf32>
    %434 = arith.addf %433, %432 : vector<1x12xf32>
    %435 = arith.maximumf %428, %434 : vector<1x12xf32>
    %436 = vector.broadcast %0 : f32 to vector<1x12xf32>
    %437 = arith.mulf %436, %421 : vector<1x12xf32>
    %438 = vector.broadcast %1 : f32 to vector<1x12xf32>
    %439 = arith.mulf %438, %435 : vector<1x12xf32>
    %440 = arith.addf %437, %439 : vector<1x12xf32>
    %441 = arith.addf %440, %16 : vector<1x12xf32>
    %442 = arith.subf %441, %325 : vector<1x12xf32>
    %443 = vector.broadcast %2 : f32 to vector<1x12xf32>
    %444 = arith.mulf %443, %421 : vector<1x12xf32>
    %445 = vector.broadcast %0 : f32 to vector<1x12xf32>
    %446 = arith.mulf %445, %435 : vector<1x12xf32>
    %447 = arith.addf %444, %446 : vector<1x12xf32>
    %448 = arith.addf %447, %23 : vector<1x12xf32>
    %449 = arith.subf %448, %407 : vector<1x12xf32>
    %cst_125 = arith.constant 0.000000e+00 : f32
    %450 = vector.broadcast %cst_125 : f32 to vector<1x12xf32>
    %451 = arith.subf %450, %235 : vector<1x12xf32>
    %452 = arith.addf %451, %442 : vector<1x12xf32>
    %cst_126 = arith.constant 3.000000e-01 : f32
    %453 = vector.broadcast %cst_126 : f32 to vector<1x12xf32>
    %454 = arith.mulf %453, %452 : vector<1x12xf32>
    %455 = arith.addf %235, %454 : vector<1x12xf32>
    %cst_127 = arith.constant 0.000000e+00 : f32
    %456 = vector.broadcast %cst_127 : f32 to vector<1x12xf32>
    %457 = arith.subf %456, %241 : vector<1x12xf32>
    %458 = arith.addf %457, %449 : vector<1x12xf32>
    %cst_128 = arith.constant 3.000000e-01 : f32
    %459 = vector.broadcast %cst_128 : f32 to vector<1x12xf32>
    %460 = arith.mulf %459, %458 : vector<1x12xf32>
    %461 = arith.addf %241, %460 : vector<1x12xf32>
    %c2_129 = arith.constant 2 : index
    %c0_130 = arith.constant 0 : index
    %462 = vector.load %arg2[%c2_129, %c0_130] : memref<8x12xf32, #tpu.memory_space<vmem>>, vector<1x12xf32>
    tpu.vector_store %arg2[%c2_129, %c0_130], %455 {strides = array<i32>} : memref<8x12xf32, #tpu.memory_space<vmem>>, vector<1x12xf32>,
    %c3_131 = arith.constant 3 : index
    %c0_132 = arith.constant 0 : index
    %463 = vector.load %arg2[%c3_131, %c0_132] : memref<8x12xf32, #tpu.memory_space<vmem>>, vector<1x12xf32>
    tpu.vector_store %arg2[%c3_131, %c0_132], %461 {strides = array<i32>} : memref<8x12xf32, #tpu.memory_space<vmem>>, vector<1x12xf32>,
    %cst_133 = arith.constant -6.280000e-01 : f32
    %464 = vector.broadcast %cst_133 : f32 to vector<1x12xf32>
    %465 = arith.mulf %464, %455 : vector<1x12xf32>
    %cst_134 = arith.constant -9.602000e-01 : f32
    %466 = vector.broadcast %cst_134 : f32 to vector<1x12xf32>
    %467 = arith.addf %466, %465 : vector<1x12xf32>
    %cst_135 = arith.constant -2.183100e+00 : f32
    %468 = vector.broadcast %cst_135 : f32 to vector<1x12xf32>
    %469 = arith.mulf %468, %455 : vector<1x12xf32>
    %470 = arith.mulf %469, %455 : vector<1x12xf32>
    %471 = arith.addf %467, %470 : vector<1x12xf32>
    %cst_136 = arith.constant 1.535900e+00 : f32
    %472 = vector.broadcast %cst_136 : f32 to vector<1x12xf32>
    %473 = arith.mulf %472, %455 : vector<1x12xf32>
    %474 = arith.mulf %473, %455 : vector<1x12xf32>
    %475 = arith.mulf %474, %455 : vector<1x12xf32>
    %476 = arith.addf %471, %475 : vector<1x12xf32>
    %cst_137 = arith.constant 1.668600e+00 : f32
    %477 = vector.broadcast %cst_137 : f32 to vector<1x12xf32>
    %478 = arith.mulf %477, %285 : vector<1x12xf32>
    %cst_138 = arith.constant 1.236300e+00 : f32
    %479 = vector.broadcast %cst_138 : f32 to vector<1x12xf32>
    %480 = arith.mulf %479, %285 : vector<1x12xf32>
    %481 = arith.mulf %480, %285 : vector<1x12xf32>
    %482 = arith.addf %478, %481 : vector<1x12xf32>
    %cst_139 = arith.constant -1.150900e+00 : f32
    %483 = vector.broadcast %cst_139 : f32 to vector<1x12xf32>
    %484 = arith.mulf %483, %285 : vector<1x12xf32>
    %485 = arith.mulf %484, %285 : vector<1x12xf32>
    %486 = arith.mulf %485, %285 : vector<1x12xf32>
    %487 = arith.addf %482, %486 : vector<1x12xf32>
    %cst_140 = arith.constant 5.227000e-01 : f32
    %488 = vector.broadcast %cst_140 : f32 to vector<1x12xf32>
    %489 = arith.mulf %488, %455 : vector<1x12xf32>
    %490 = arith.mulf %489, %285 : vector<1x12xf32>
    %cst_141 = arith.constant -1.854300e+00 : f32
    %491 = vector.broadcast %cst_141 : f32 to vector<1x12xf32>
    %492 = arith.mulf %491, %455 : vector<1x12xf32>
    %493 = arith.mulf %492, %285 : vector<1x12xf32>
    %494 = arith.mulf %493, %285 : vector<1x12xf32>
    %495 = arith.addf %490, %494 : vector<1x12xf32>
    %cst_142 = arith.constant -4.500000e-02 : f32
    %496 = vector.broadcast %cst_142 : f32 to vector<1x12xf32>
    %497 = arith.mulf %496, %455 : vector<1x12xf32>
    %498 = arith.mulf %497, %455 : vector<1x12xf32>
    %499 = arith.mulf %498, %285 : vector<1x12xf32>
    %500 = arith.addf %495, %499 : vector<1x12xf32>
    %501 = arith.addf %476, %487 : vector<1x12xf32>
    %502 = arith.addf %501, %500 : vector<1x12xf32>
    %cst_143 = arith.constant 3.000000e-01 : f32
    %503 = vector.broadcast %cst_143 : f32 to vector<1x12xf32>
    %504 = arith.mulf %503, %502 : vector<1x12xf32>
    %505 = arith.addf %285, %504 : vector<1x12xf32>
    %cst_144 = arith.constant -1.290300e+00 : f32
    %506 = vector.broadcast %cst_144 : f32 to vector<1x12xf32>
    %507 = arith.mulf %506, %455 : vector<1x12xf32>
    %cst_145 = arith.constant -1.204000e+00 : f32
    %508 = vector.broadcast %cst_145 : f32 to vector<1x12xf32>
    %509 = arith.addf %508, %507 : vector<1x12xf32>
    %cst_146 = arith.constant -1.515800e+00 : f32
    %510 = vector.broadcast %cst_146 : f32 to vector<1x12xf32>
    %511 = arith.mulf %510, %455 : vector<1x12xf32>
    %512 = arith.mulf %511, %455 : vector<1x12xf32>
    %513 = arith.addf %509, %512 : vector<1x12xf32>
    %cst_147 = arith.constant -2.210000e-01 : f32
    %514 = vector.broadcast %cst_147 : f32 to vector<1x12xf32>
    %515 = arith.mulf %514, %455 : vector<1x12xf32>
    %516 = arith.mulf %515, %455 : vector<1x12xf32>
    %517 = arith.mulf %516, %455 : vector<1x12xf32>
    %518 = arith.addf %513, %517 : vector<1x12xf32>
    %cst_148 = arith.constant 0.648899972 : f32
    %519 = vector.broadcast %cst_148 : f32 to vector<1x12xf32>
    %520 = arith.mulf %519, %505 : vector<1x12xf32>
    %cst_149 = arith.constant 8.607000e-01 : f32
    %521 = vector.broadcast %cst_149 : f32 to vector<1x12xf32>
    %522 = arith.mulf %521, %505 : vector<1x12xf32>
    %523 = arith.mulf %522, %505 : vector<1x12xf32>
    %524 = arith.addf %520, %523 : vector<1x12xf32>
    %cst_150 = arith.constant -0.844399988 : f32
    %525 = vector.broadcast %cst_150 : f32 to vector<1x12xf32>
    %526 = arith.mulf %525, %505 : vector<1x12xf32>
    %527 = arith.mulf %526, %505 : vector<1x12xf32>
    %528 = arith.mulf %527, %505 : vector<1x12xf32>
    %529 = arith.addf %524, %528 : vector<1x12xf32>
    %cst_151 = arith.constant 2.612000e-01 : f32
    %530 = vector.broadcast %cst_151 : f32 to vector<1x12xf32>
    %531 = arith.mulf %530, %455 : vector<1x12xf32>
    %532 = arith.mulf %531, %505 : vector<1x12xf32>
    %cst_152 = arith.constant -4.397000e-01 : f32
    %533 = vector.broadcast %cst_152 : f32 to vector<1x12xf32>
    %534 = arith.mulf %533, %455 : vector<1x12xf32>
    %535 = arith.mulf %534, %505 : vector<1x12xf32>
    %536 = arith.mulf %535, %505 : vector<1x12xf32>
    %537 = arith.addf %532, %536 : vector<1x12xf32>
    %cst_153 = arith.constant 1.084200e+00 : f32
    %538 = vector.broadcast %cst_153 : f32 to vector<1x12xf32>
    %539 = arith.mulf %538, %455 : vector<1x12xf32>
    %540 = arith.mulf %539, %455 : vector<1x12xf32>
    %541 = arith.mulf %540, %505 : vector<1x12xf32>
    %542 = arith.addf %537, %541 : vector<1x12xf32>
    %543 = arith.addf %518, %529 : vector<1x12xf32>
    %544 = arith.addf %543, %542 : vector<1x12xf32>
    %545 = arith.mulf %455, %544 : vector<1x12xf32>
    %cst_154 = arith.constant -6.280000e-01 : f32
    %546 = vector.broadcast %cst_154 : f32 to vector<1x12xf32>
    %547 = arith.mulf %546, %461 : vector<1x12xf32>
    %cst_155 = arith.constant -9.602000e-01 : f32
    %548 = vector.broadcast %cst_155 : f32 to vector<1x12xf32>
    %549 = arith.addf %548, %547 : vector<1x12xf32>
    %cst_156 = arith.constant -2.183100e+00 : f32
    %550 = vector.broadcast %cst_156 : f32 to vector<1x12xf32>
    %551 = arith.mulf %550, %461 : vector<1x12xf32>
    %552 = arith.mulf %551, %461 : vector<1x12xf32>
    %553 = arith.addf %549, %552 : vector<1x12xf32>
    %cst_157 = arith.constant 1.535900e+00 : f32
    %554 = vector.broadcast %cst_157 : f32 to vector<1x12xf32>
    %555 = arith.mulf %554, %461 : vector<1x12xf32>
    %556 = arith.mulf %555, %461 : vector<1x12xf32>
    %557 = arith.mulf %556, %461 : vector<1x12xf32>
    %558 = arith.addf %553, %557 : vector<1x12xf32>
    %cst_158 = arith.constant 1.668600e+00 : f32
    %559 = vector.broadcast %cst_158 : f32 to vector<1x12xf32>
    %560 = arith.mulf %559, %367 : vector<1x12xf32>
    %cst_159 = arith.constant 1.236300e+00 : f32
    %561 = vector.broadcast %cst_159 : f32 to vector<1x12xf32>
    %562 = arith.mulf %561, %367 : vector<1x12xf32>
    %563 = arith.mulf %562, %367 : vector<1x12xf32>
    %564 = arith.addf %560, %563 : vector<1x12xf32>
    %cst_160 = arith.constant -1.150900e+00 : f32
    %565 = vector.broadcast %cst_160 : f32 to vector<1x12xf32>
    %566 = arith.mulf %565, %367 : vector<1x12xf32>
    %567 = arith.mulf %566, %367 : vector<1x12xf32>
    %568 = arith.mulf %567, %367 : vector<1x12xf32>
    %569 = arith.addf %564, %568 : vector<1x12xf32>
    %cst_161 = arith.constant 5.227000e-01 : f32
    %570 = vector.broadcast %cst_161 : f32 to vector<1x12xf32>
    %571 = arith.mulf %570, %461 : vector<1x12xf32>
    %572 = arith.mulf %571, %367 : vector<1x12xf32>
    %cst_162 = arith.constant -1.854300e+00 : f32
    %573 = vector.broadcast %cst_162 : f32 to vector<1x12xf32>
    %574 = arith.mulf %573, %461 : vector<1x12xf32>
    %575 = arith.mulf %574, %367 : vector<1x12xf32>
    %576 = arith.mulf %575, %367 : vector<1x12xf32>
    %577 = arith.addf %572, %576 : vector<1x12xf32>
    %cst_163 = arith.constant -4.500000e-02 : f32
    %578 = vector.broadcast %cst_163 : f32 to vector<1x12xf32>
    %579 = arith.mulf %578, %461 : vector<1x12xf32>
    %580 = arith.mulf %579, %461 : vector<1x12xf32>
    %581 = arith.mulf %580, %367 : vector<1x12xf32>
    %582 = arith.addf %577, %581 : vector<1x12xf32>
    %583 = arith.addf %558, %569 : vector<1x12xf32>
    %584 = arith.addf %583, %582 : vector<1x12xf32>
    %cst_164 = arith.constant 3.000000e-01 : f32
    %585 = vector.broadcast %cst_164 : f32 to vector<1x12xf32>
    %586 = arith.mulf %585, %584 : vector<1x12xf32>
    %587 = arith.addf %367, %586 : vector<1x12xf32>
    %cst_165 = arith.constant -1.290300e+00 : f32
    %588 = vector.broadcast %cst_165 : f32 to vector<1x12xf32>
    %589 = arith.mulf %588, %461 : vector<1x12xf32>
    %cst_166 = arith.constant -1.204000e+00 : f32
    %590 = vector.broadcast %cst_166 : f32 to vector<1x12xf32>
    %591 = arith.addf %590, %589 : vector<1x12xf32>
    %cst_167 = arith.constant -1.515800e+00 : f32
    %592 = vector.broadcast %cst_167 : f32 to vector<1x12xf32>
    %593 = arith.mulf %592, %461 : vector<1x12xf32>
    %594 = arith.mulf %593, %461 : vector<1x12xf32>
    %595 = arith.addf %591, %594 : vector<1x12xf32>
    %cst_168 = arith.constant -2.210000e-01 : f32
    %596 = vector.broadcast %cst_168 : f32 to vector<1x12xf32>
    %597 = arith.mulf %596, %461 : vector<1x12xf32>
    %598 = arith.mulf %597, %461 : vector<1x12xf32>
    %599 = arith.mulf %598, %461 : vector<1x12xf32>
    %600 = arith.addf %595, %599 : vector<1x12xf32>
    %cst_169 = arith.constant 0.648899972 : f32
    %601 = vector.broadcast %cst_169 : f32 to vector<1x12xf32>
    %602 = arith.mulf %601, %587 : vector<1x12xf32>
    %cst_170 = arith.constant 8.607000e-01 : f32
    %603 = vector.broadcast %cst_170 : f32 to vector<1x12xf32>
    %604 = arith.mulf %603, %587 : vector<1x12xf32>
    %605 = arith.mulf %604, %587 : vector<1x12xf32>
    %606 = arith.addf %602, %605 : vector<1x12xf32>
    %cst_171 = arith.constant -0.844399988 : f32
    %607 = vector.broadcast %cst_171 : f32 to vector<1x12xf32>
    %608 = arith.mulf %607, %587 : vector<1x12xf32>
    %609 = arith.mulf %608, %587 : vector<1x12xf32>
    %610 = arith.mulf %609, %587 : vector<1x12xf32>
    %611 = arith.addf %606, %610 : vector<1x12xf32>
    %cst_172 = arith.constant 2.612000e-01 : f32
    %612 = vector.broadcast %cst_172 : f32 to vector<1x12xf32>
    %613 = arith.mulf %612, %461 : vector<1x12xf32>
    %614 = arith.mulf %613, %587 : vector<1x12xf32>
    %cst_173 = arith.constant -4.397000e-01 : f32
    %615 = vector.broadcast %cst_173 : f32 to vector<1x12xf32>
    %616 = arith.mulf %615, %461 : vector<1x12xf32>
    %617 = arith.mulf %616, %587 : vector<1x12xf32>
    %618 = arith.mulf %617, %587 : vector<1x12xf32>
    %619 = arith.addf %614, %618 : vector<1x12xf32>
    %cst_174 = arith.constant 1.084200e+00 : f32
    %620 = vector.broadcast %cst_174 : f32 to vector<1x12xf32>
    %621 = arith.mulf %620, %461 : vector<1x12xf32>
    %622 = arith.mulf %621, %461 : vector<1x12xf32>
    %623 = arith.mulf %622, %587 : vector<1x12xf32>
    %624 = arith.addf %619, %623 : vector<1x12xf32>
    %625 = arith.addf %600, %611 : vector<1x12xf32>
    %626 = arith.addf %625, %624 : vector<1x12xf32>
    %627 = arith.mulf %461, %626 : vector<1x12xf32>
    %cst_175 = arith.constant 1.000000e+00 : f32
    %628 = vector.broadcast %cst_175 : f32 to vector<1x12xf32>
    %629 = arith.subf %455, %628 : vector<1x12xf32>
    %cst_176 = arith.constant 0.00999999977 : f32
    %630 = vector.broadcast %cst_176 : f32 to vector<1x12xf32>
    %631 = arith.mulf %630, %629 : vector<1x12xf32>
    %cst_177 = arith.constant 1.000000e+00 : f32
    %632 = vector.broadcast %cst_177 : f32 to vector<1x12xf32>
    %633 = arith.addf %632, %631 : vector<1x12xf32>
    %634 = arith.minimumf %455, %633 : vector<1x12xf32>
    %cst_178 = arith.constant 1.000000e+00 : f32
    %635 = vector.broadcast %cst_178 : f32 to vector<1x12xf32>
    %636 = arith.addf %634, %635 : vector<1x12xf32>
    %cst_179 = arith.constant 0.00999999977 : f32
    %637 = vector.broadcast %cst_179 : f32 to vector<1x12xf32>
    %638 = arith.mulf %637, %636 : vector<1x12xf32>
    %cst_180 = arith.constant -1.000000e+00 : f32
    %639 = vector.broadcast %cst_180 : f32 to vector<1x12xf32>
    %640 = arith.addf %639, %638 : vector<1x12xf32>
    %641 = arith.maximumf %634, %640 : vector<1x12xf32>
    %cst_181 = arith.constant 1.000000e+00 : f32
    %642 = vector.broadcast %cst_181 : f32 to vector<1x12xf32>
    %643 = arith.subf %461, %642 : vector<1x12xf32>
    %cst_182 = arith.constant 0.00999999977 : f32
    %644 = vector.broadcast %cst_182 : f32 to vector<1x12xf32>
    %645 = arith.mulf %644, %643 : vector<1x12xf32>
    %cst_183 = arith.constant 1.000000e+00 : f32
    %646 = vector.broadcast %cst_183 : f32 to vector<1x12xf32>
    %647 = arith.addf %646, %645 : vector<1x12xf32>
    %648 = arith.minimumf %461, %647 : vector<1x12xf32>
    %cst_184 = arith.constant 1.000000e+00 : f32
    %649 = vector.broadcast %cst_184 : f32 to vector<1x12xf32>
    %650 = arith.addf %648, %649 : vector<1x12xf32>
    %cst_185 = arith.constant 0.00999999977 : f32
    %651 = vector.broadcast %cst_185 : f32 to vector<1x12xf32>
    %652 = arith.mulf %651, %650 : vector<1x12xf32>
    %cst_186 = arith.constant -1.000000e+00 : f32
    %653 = vector.broadcast %cst_186 : f32 to vector<1x12xf32>
    %654 = arith.addf %653, %652 : vector<1x12xf32>
    %655 = arith.maximumf %648, %654 : vector<1x12xf32>
    %656 = vector.broadcast %0 : f32 to vector<1x12xf32>
    %657 = arith.mulf %656, %641 : vector<1x12xf32>
    %658 = vector.broadcast %1 : f32 to vector<1x12xf32>
    %659 = arith.mulf %658, %655 : vector<1x12xf32>
    %660 = arith.addf %657, %659 : vector<1x12xf32>
    %661 = arith.addf %660, %16 : vector<1x12xf32>
    %662 = arith.subf %661, %545 : vector<1x12xf32>
    %663 = vector.broadcast %2 : f32 to vector<1x12xf32>
    %664 = arith.mulf %663, %641 : vector<1x12xf32>
    %665 = vector.broadcast %0 : f32 to vector<1x12xf32>
    %666 = arith.mulf %665, %655 : vector<1x12xf32>
    %667 = arith.addf %664, %666 : vector<1x12xf32>
    %668 = arith.addf %667, %23 : vector<1x12xf32>
    %669 = arith.subf %668, %627 : vector<1x12xf32>
    %cst_187 = arith.constant 0.000000e+00 : f32
    %670 = vector.broadcast %cst_187 : f32 to vector<1x12xf32>
    %671 = arith.subf %670, %455 : vector<1x12xf32>
    %672 = arith.addf %671, %662 : vector<1x12xf32>
    %cst_188 = arith.constant 3.000000e-01 : f32
    %673 = vector.broadcast %cst_188 : f32 to vector<1x12xf32>
    %674 = arith.mulf %673, %672 : vector<1x12xf32>
    %675 = arith.addf %455, %674 : vector<1x12xf32>
    %cst_189 = arith.constant 0.000000e+00 : f32
    %676 = vector.broadcast %cst_189 : f32 to vector<1x12xf32>
    %677 = arith.subf %676, %461 : vector<1x12xf32>
    %678 = arith.addf %677, %669 : vector<1x12xf32>
    %cst_190 = arith.constant 3.000000e-01 : f32
    %679 = vector.broadcast %cst_190 : f32 to vector<1x12xf32>
    %680 = arith.mulf %679, %678 : vector<1x12xf32>
    %681 = arith.addf %461, %680 : vector<1x12xf32>
    %c4_191 = arith.constant 4 : index
    %c0_192 = arith.constant 0 : index
    %682 = vector.load %arg2[%c4_191, %c0_192] : memref<8x12xf32, #tpu.memory_space<vmem>>, vector<1x12xf32>
    tpu.vector_store %arg2[%c4_191, %c0_192], %675 {strides = array<i32>} : memref<8x12xf32, #tpu.memory_space<vmem>>, vector<1x12xf32>,
    %c5_193 = arith.constant 5 : index
    %c0_194 = arith.constant 0 : index
    %683 = vector.load %arg2[%c5_193, %c0_194] : memref<8x12xf32, #tpu.memory_space<vmem>>, vector<1x12xf32>
    tpu.vector_store %arg2[%c5_193, %c0_194], %681 {strides = array<i32>} : memref<8x12xf32, #tpu.memory_space<vmem>>, vector<1x12xf32>,
    %c6 = arith.constant 6 : index
    %c0_195 = arith.constant 0 : index
    %684 = vector.load %arg2[%c6, %c0_195] : memref<8x12xf32, #tpu.memory_space<vmem>>, vector<1x12xf32>
    tpu.vector_store %arg2[%c6, %c0_195], %641 {strides = array<i32>} : memref<8x12xf32, #tpu.memory_space<vmem>>, vector<1x12xf32>,
    %c7 = arith.constant 7 : index
    %c0_196 = arith.constant 0 : index
    %685 = vector.load %arg2[%c7, %c0_196] : memref<8x12xf32, #tpu.memory_space<vmem>>, vector<1x12xf32>
    tpu.vector_store %arg2[%c7, %c0_196], %655 {strides = array<i32>} : memref<8x12xf32, #tpu.memory_space<vmem>>, vector<1x12xf32>,
    return
  }
}

</mosaic_0001>

<llo_original>
// kernel: memcenn_forward.1
$region0: #{memcenn_forward.1}
  #allocation0 [shape = 'u32[]', space=smem, size = 0x4, offset = 0x4, fixed_abs, tag = 'smem constant byte address 0x4 - core index']
  #allocation1 [shape = 'u32[144,128]{1,0:T(1,128)}', space=vmem, size = 0x12000, scoped, tag = 'internal scratch']
  %s0 = inlined_call_operand.vmem [shape: f32[6], index: 0, kind: input, shape index: {}]
  %s1 = inlined_call_operand.vmem [shape: f32[4,12], index: 1, kind: input, shape index: {}]
  %s2 = inlined_call_operand.vmem [shape: f32[8,12], index: 2, kind: output, shape index: {}]
  %s3 = sld [smem:[#allocation0]]
  $region22: #{memcenn_forward.1} parent=0
    _
  %s5 = ssub.s32 1, %s3
  %s6 = scalar_select 0, %s5, %s3
  $region1: #{memcenn_forward.1} parent=0
    #allocation2 [shape = 'u8[512]{0}', space=smem, size = 0x200, scoped, tag = 'input window, operand 0, single buffered']
    #allocation3 [shape = 's32[1]{0}', space=sflag, size = 0x4, scoped, tag = 'scoped memory for memcenn_forward.1']
    %7 = vsyncpa [#allocation3], 0
    // Predicated region
    $region2: #{memcenn_forward.1} parent=1 // pred_check
      _
    $region3: #{memcenn_forward.1} parent=1 // pred_check_branch
      %9 = sbr.rel (0) target = $region5
    $region4: #{memcenn_forward.1} parent=1 // pred_region
      %s11 = ssub.s32 16, 16
      %12 = vsyncadd [#allocation3], %s11
      %s14 = sshll.u32 %s0, 4
      %s15 = int_to_ptr.vmem [resolvable:$true] %s14
      %17 = dma.vmem_to_smem %s15, 16, [#allocation2], [#allocation3]
    $region5: #{memcenn_forward.1} parent=1 // pred_fallthru
      _
    // Predicated region
    $region6: #{memcenn_forward.1} parent=1 // pred_check
      _
    $region7: #{memcenn_forward.1} parent=1 // pred_check_branch
      %19 = sbr.rel (0) target = $region9
    $region8: #{memcenn_forward.1} parent=1 // pred_region
      _
    $region9: #{memcenn_forward.1} parent=1 // pred_fallthru
      _
    // Predicated region
    $region10: #{memcenn_forward.1} parent=1 // pred_check
      _
    $region11: #{memcenn_forward.1} parent=1 // pred_check_branch
      %21 = sbr.rel (0) target = $region13
    $region12: #{memcenn_forward.1} parent=1 // pred_region
      %22 = dma.done [#allocation3], 16
    $region13: #{memcenn_forward.1} parent=1 // pred_fallthru
      _
    %23 = sfence
    %s24 = sld [smem:[#allocation2]]
    %s25 = sld [smem:[#allocation2 + $0x1]]
    %s26 = sld [smem:[#allocation2 + $0x2]]
    %s27 = sld [smem:[#allocation2 + $0x3]]
    %s28 = sld [smem:[#allocation2 + $0x4]]
    %s29 = sld [smem:[#allocation2 + $0x5]]
    %v30 = vld [vmem:[%s1] sm:$0x1]
    %v31 = vld [vmem:[%s1 + $0x1] sm:$0x1]
    %v32 = vld [vmem:[%s1 + $0x2] sm:$0x1]
    %v33 = vld [vmem:[%s1 + $0x3] sm:$0x1]
    %v34 = vstv %s27
    %v35 = vmul.f32 %v34, %v30
    %v36 = vstv %s28
    %v37 = vmul.f32 %v36, %v31
    %v38 = vadd.f32 %v35, %v37
    %v39 = vadd.f32 %v38, -1.9875
    %v40 = vstv %s29
    %v41 = vmul.f32 %v40, %v30
    %v42 = vmul.f32 %v34, %v31
    %v43 = vadd.f32 %v41, %v42
    %v44 = vadd.f32 %v43, -1.9875
    %v45 = vmul.f32 %v30, -0.628
    %v46 = vadd.f32 %v45, -0.9602
    %v47 = vmul.f32 %v30, -2.1831
    %v48 = vmul.f32 %v47, %v30
    %v49 = vadd.f32 %v46, %v48
    %v50 = vmul.f32 %v30, 1.5359
    %v51 = vmul.f32 %v50, %v30
    %v52 = vmul.f32 %v51, %v30
    %v53 = vadd.f32 %v49, %v52
    %v54 = vmul.f32 %v32, 1.6686
    %v55 = vmul.f32 %v32, 1.2363
    %v56 = vmul.f32 %v55, %v32
    %v57 = vadd.f32 %v54, %v56
    %v58 = vmul.f32 %v32, -1.1509
    %v59 = vmul.f32 %v58, %v32
    %v60 = vmul.f32 %v59, %v32
    %v61 = vadd.f32 %v57, %v60
    %v62 = vmul.f32 %v30, 0.5227
    %v63 = vmul.f32 %v62, %v32
    %v64 = vmul.f32 %v30, -1.8543
    %v65 = vmul.f32 %v64, %v32
    %v66 = vmul.f32 %v65, %v32
    %v67 = vadd.f32 %v63, %v66
    %v68 = vmul.f32 %v30, -0.045
    %v69 = vmul.f32 %v68, %v30
    %v70 = vmul.f32 %v69, %v32
    %v71 = vadd.f32 %v67, %v70
    %v72 = vadd.f32 %v53, %v61
    %v73 = vadd.f32 %v72, %v71
    %v74 = vmul.f32 %v73, 0.3
    %v75 = vadd.f32 %v32, %v74
    %v76 = vmul.f32 %v30, -1.2903
    %v77 = vadd.f32 %v76, -1.204
    %v78 = vmul.f32 %v30, -1.5158
    %v79 = vmul.f32 %v78, %v30
    %v80 = vadd.f32 %v77, %v79
    %v81 = vmul.f32 %v30, -0.221
    %v82 = vmul.f32 %v81, %v30
    %v83 = vmul.f32 %v82, %v30
    %v84 = vadd.f32 %v80, %v83
    %v85 = vmul.f32 %v75, 0.6489
    %v86 = vmul.f32 %v75, 0.8607
    %v87 = vmul.f32 %v86, %v75
    %v88 = vadd.f32 %v85, %v87
    %v89 = vmul.f32 %v75, -0.8444
    %v90 = vmul.f32 %v89, %v75
    %v91 = vmul.f32 %v90, %v75
    %v92 = vadd.f32 %v88, %v91
    %v93 = vmul.f32 %v30, 0.2612
    %v94 = vmul.f32 %v93, %v75
    %v95 = vmul.f32 %v30, -0.4397
    %v96 = vmul.f32 %v95, %v75
    %v97 = vmul.f32 %v96, %v75
    %v98 = vadd.f32 %v94, %v97
    %v99 = vmul.f32 %v30, 1.0842
    %v100 = vmul.f32 %v99, %v30
    %v101 = vmul.f32 %v100, %v75
    %v102 = vadd.f32 %v98, %v101
    %v103 = vadd.f32 %v84, %v92
    %v104 = vadd.f32 %v103, %v102
    %v105 = vmul.f32 %v30, %v104
    %v106 = vmul.f32 %v31, -0.628
    %v107 = vadd.f32 %v106, -0.9602
    %v108 = vmul.f32 %v31, -2.1831
    %v109 = vmul.f32 %v108, %v31
    %v110 = vadd.f32 %v107, %v109
    %v111 = vmul.f32 %v31, 1.5359
    %v112 = vmul.f32 %v111, %v31
    %v113 = vmul.f32 %v112, %v31
    %v114 = vadd.f32 %v110, %v113
    %v115 = vmul.f32 %v33, 1.6686
    %v116 = vmul.f32 %v33, 1.2363
    %v117 = vmul.f32 %v116, %v33
    %v118 = vadd.f32 %v115, %v117
    %v119 = vmul.f32 %v33, -1.1509
    %v120 = vmul.f32 %v119, %v33
    %v121 = vmul.f32 %v120, %v33
    %v122 = vadd.f32 %v118, %v121
    %v123 = vmul.f32 %v31, 0.5227
    %v124 = vmul.f32 %v123, %v33
    %v125 = vmul.f32 %v31, -1.8543
    %v126 = vmul.f32 %v125, %v33
    %v127 = vmul.f32 %v126, %v33
    %v128 = vadd.f32 %v124, %v127
    %v129 = vmul.f32 %v31, -0.045
    %v130 = vmul.f32 %v129, %v31
    %v131 = vmul.f32 %v130, %v33
    %v132 = vadd.f32 %v128, %v131
    %v133 = vadd.f32 %v114, %v122
    %v134 = vadd.f32 %v133, %v132
    %v135 = vmul.f32 %v134, 0.3
    %v136 = vadd.f32 %v33, %v135
    %v137 = vmul.f32 %v31, -1.2903
    %v138 = vadd.f32 %v137, -1.204
    %v139 = vmul.f32 %v31, -1.5158
    %v140 = vmul.f32 %v139, %v31
    %v141 = vadd.f32 %v138, %v140
    %v142 = vmul.f32 %v31, -0.221
    %v143 = vmul.f32 %v142, %v31
    %v144 = vmul.f32 %v143, %v31
    %v145 = vadd.f32 %v141, %v144
    %v146 = vmul.f32 %v136, 0.6489
    %v147 = vmul.f32 %v136, 0.8607
    %v148 = vmul.f32 %v147, %v136
    %v149 = vadd.f32 %v146, %v148
    %v150 = vmul.f32 %v136, -0.8444
    %v151 = vmul.f32 %v150, %v136
    %v152 = vmul.f32 %v151, %v136
    %v153 = vadd.f32 %v149, %v152
    %v154 = vmul.f32 %v31, 0.2612
    %v155 = vmul.f32 %v154, %v136
    %v156 = vmul.f32 %v31, -0.4397
    %v157 = vmul.f32 %v156, %v136
    %v158 = vmul.f32 %v157, %v136
    %v159 = vadd.f32 %v155, %v158
    %v160 = vmul.f32 %v31, 1.0842
    %v161 = vmul.f32 %v160, %v31
    %v162 = vmul.f32 %v161, %v136
    %v163 = vadd.f32 %v159, %v162
    %v164 = vadd.f32 %v145, %v153
    %v165 = vadd.f32 %v164, %v163
    %v166 = vmul.f32 %v31, %v165
    %v167 = vsub.f32 %v30, 1.0
    %v168 = vmul.f32 %v167, 0.01
    %v169 = vadd.f32 %v168, 1.0
    %v170 = vmin.f32 %v30, %v169
    %v171 = vadd.f32 %v170, 1.0
    %v172 = vmul.f32 %v171, 0.01
    %v173 = vadd.f32 %v172, -1.0
    %v174 = vmax.f32 %v170, %v173
    %v175 = vsub.f32 %v31, 1.0
    %v176 = vmul.f32 %v175, 0.01
    %v177 = vadd.f32 %v176, 1.0
    %v178 = vmin.f32 %v31, %v177
    %v179 = vadd.f32 %v178, 1.0
    %v180 = vmul.f32 %v179, 0.01
    %v181 = vadd.f32 %v180, -1.0
    %v182 = vmax.f32 %v178, %v181
    %v183 = vstv %s24
    %v184 = vmul.f32 %v183, %v174
    %v185 = vstv %s25
    %v186 = vmul.f32 %v185, %v182
    %v187 = vadd.f32 %v184, %v186
    %v188 = vadd.f32 %v187, %v39
    %v189 = vsub.f32 %v188, %v105
    %v190 = vstv %s26
    %v191 = vmul.f32 %v190, %v174
    %v192 = vmul.f32 %v183, %v182
    %v193 = vadd.f32 %v191, %v192
    %v194 = vadd.f32 %v193, %v44
    %v195 = vsub.f32 %v194, %v166
    %v196 = vsub.f32 0.0, %v30
    %v197 = vadd.f32 %v196, %v189
    %v198 = vmul.f32 %v197, 0.3
    %v199 = vadd.f32 %v30, %v198
    %v200 = vsub.f32 0.0, %v31
    %v201 = vadd.f32 %v200, %v195
    %v202 = vmul.f32 %v201, 0.3
    %v203 = vadd.f32 %v31, %v202
    %vm204 = vcmask 90112
    %205 = vst.msk [vmem:[%s2] sm:$0x1] %vm204, %v199
    %206 = vst.msk [vmem:[%s2 + $0x1] sm:$0x1] %vm204, %v203
    %v207 = vmul.f32 %v199, -0.628
    %v208 = vadd.f32 %v207, -0.9602
    %v209 = vmul.f32 %v199, -2.1831
    %v210 = vmul.f32 %v209, %v199
    %v211 = vadd.f32 %v208, %v210
    %v212 = vmul.f32 %v199, 1.5359
    %v213 = vmul.f32 %v212, %v199
    %v214 = vmul.f32 %v213, %v199
    %v215 = vadd.f32 %v211, %v214
    %v216 = vmul.f32 %v75, 1.6686
    %v217 = vmul.f32 %v75, 1.2363
    %v218 = vmul.f32 %v217, %v75
    %v219 = vadd.f32 %v216, %v218
    %v220 = vmul.f32 %v75, -1.1509
    %v221 = vmul.f32 %v220, %v75
    %v222 = vmul.f32 %v221, %v75
    %v223 = vadd.f32 %v219, %v222
    %v224 = vmul.f32 %v199, 0.5227
    %v225 = vmul.f32 %v224, %v75
    %v226 = vmul.f32 %v199, -1.8543
    %v227 = vmul.f32 %v226, %v75
    %v228 = vmul.f32 %v227, %v75
    %v229 = vadd.f32 %v225, %v228
    %v230 = vmul.f32 %v199, -0.045
    %v231 = vmul.f32 %v230, %v199
    %v232 = vmul.f32 %v231, %v75
    %v233 = vadd.f32 %v229, %v232
    %v234 = vadd.f32 %v215, %v223
    %v235 = vadd.f32 %v234, %v233
    %v236 = vmul.f32 %v235, 0.3
    %v237 = vadd.f32 %v75, %v236
    %v238 = vmul.f32 %v199, -1.2903
    %v239 = vadd.f32 %v238, -1.204
    %v240 = vmul.f32 %v199, -1.5158
    %v241 = vmul.f32 %v240, %v199
    %v242 = vadd.f32 %v239, %v241
    %v243 = vmul.f32 %v199, -0.221
    %v244 = vmul.f32 %v243, %v199
    %v245 = vmul.f32 %v244, %v199
    %v246 = vadd.f32 %v242, %v245
    %v247 = vmul.f32 %v237, 0.6489
    %v248 = vmul.f32 %v237, 0.8607
    %v249 = vmul.f32 %v248, %v237
    %v250 = vadd.f32 %v247, %v249
    %v251 = vmul.f32 %v237, -0.8444
    %v252 = vmul.f32 %v251, %v237
    %v253 = vmul.f32 %v252, %v237
    %v254 = vadd.f32 %v250, %v253
    %v255 = vmul.f32 %v199, 0.2612
    %v256 = vmul.f32 %v255, %v237
    %v257 = vmul.f32 %v199, -0.4397
    %v258 = vmul.f32 %v257, %v237
    %v259 = vmul.f32 %v258, %v237
    %v260 = vadd.f32 %v256, %v259
    %v261 = vmul.f32 %v199, 1.0842
    %v262 = vmul.f32 %v261, %v199
    %v263 = vmul.f32 %v262, %v237
    %v264 = vadd.f32 %v260, %v263
    %v265 = vadd.f32 %v246, %v254
    %v266 = vadd.f32 %v265, %v264
    %v267 = vmul.f32 %v199, %v266
    %v268 = vmul.f32 %v203, -0.628
    %v269 = vadd.f32 %v268, -0.9602
    %v270 = vmul.f32 %v203, -2.1831
    %v271 = vmul.f32 %v270, %v203
    %v272 = vadd.f32 %v269, %v271
    %v273 = vmul.f32 %v203, 1.5359
    %v274 = vmul.f32 %v273, %v203
    %v275 = vmul.f32 %v274, %v203
    %v276 = vadd.f32 %v272, %v275
    %v277 = vmul.f32 %v136, 1.6686
    %v278 = vmul.f32 %v136, 1.2363
    %v279 = vmul.f32 %v278, %v136
    %v280 = vadd.f32 %v277, %v279
    %v281 = vmul.f32 %v136, -1.1509
    %v282 = vmul.f32 %v281, %v136
    %v283 = vmul.f32 %v282, %v136
    %v284 = vadd.f32 %v280, %v283
    %v285 = vmul.f32 %v203, 0.5227
    %v286 = vmul.f32 %v285, %v136
    %v287 = vmul.f32 %v203, -1.8543
    %v288 = vmul.f32 %v287, %v136
    %v289 = vmul.f32 %v288, %v136
    %v290 = vadd.f32 %v286, %v289
    %v291 = vmul.f32 %v203, -0.045
    %v292 = vmul.f32 %v291, %v203
    %v293 = vmul.f32 %v292, %v136
    %v294 = vadd.f32 %v290, %v293
    %v295 = vadd.f32 %v276, %v284
    %v296 = vadd.f32 %v295, %v294
    %v297 = vmul.f32 %v296, 0.3
    %v298 = vadd.f32 %v136, %v297
    %v299 = vmul.f32 %v203, -1.2903
    %v300 = vadd.f32 %v299, -1.204
    %v301 = vmul.f32 %v203, -1.5158
    %v302 = vmul.f32 %v301, %v203
    %v303 = vadd.f32 %v300, %v302
    %v304 = vmul.f32 %v203, -0.221
    %v305 = vmul.f32 %v304, %v203
    %v306 = vmul.f32 %v305, %v203
    %v307 = vadd.f32 %v303, %v306
    %v308 = vmul.f32 %v298, 0.6489
    %v309 = vmul.f32 %v298, 0.8607
    %v310 = vmul.f32 %v309, %v298
    %v311 = vadd.f32 %v308, %v310
    %v312 = vmul.f32 %v298, -0.8444
    %v313 = vmul.f32 %v312, %v298
    %v314 = vmul.f32 %v313, %v298
    %v315 = vadd.f32 %v311, %v314
    %v316 = vmul.f32 %v203, 0.2612
    %v317 = vmul.f32 %v316, %v298
    %v318 = vmul.f32 %v203, -0.4397
    %v319 = vmul.f32 %v318, %v298
    %v320 = vmul.f32 %v319, %v298
    %v321 = vadd.f32 %v317, %v320
    %v322 = vmul.f32 %v203, 1.0842
    %v323 = vmul.f32 %v322, %v203
    %v324 = vmul.f32 %v323, %v298
    %v325 = vadd.f32 %v321, %v324
    %v326 = vadd.f32 %v307, %v315
    %v327 = vadd.f32 %v326, %v325
    %v328 = vmul.f32 %v203, %v327
    %v329 = vsub.f32 %v199, 1.0
    %v330 = vmul.f32 %v329, 0.01
    %v331 = vadd.f32 %v330, 1.0
    %v332 = vmin.f32 %v199, %v331
    %v333 = vadd.f32 %v332, 1.0
    %v334 = vmul.f32 %v333, 0.01
    %v335 = vadd.f32 %v334, -1.0
    %v336 = vmax.f32 %v332, %v335
    %v337 = vsub.f32 %v203, 1.0
    %v338 = vmul.f32 %v337, 0.01
    %v339 = vadd.f32 %v338, 1.0
    %v340 = vmin.f32 %v203, %v339
    %v341 = vadd.f32 %v340, 1.0
    %v342 = vmul.f32 %v341, 0.01
    %v343 = vadd.f32 %v342, -1.0
    %v344 = vmax.f32 %v340, %v343
    %v345 = vmul.f32 %v183, %v336
    %v346 = vmul.f32 %v185, %v344
    %v347 = vadd.f32 %v345, %v346
    %v348 = vadd.f32 %v347, %v39
    %v349 = vsub.f32 %v348, %v267
    %v350 = vmul.f32 %v190, %v336
    %v351 = vmul.f32 %v183, %v344
    %v352 = vadd.f32 %v350, %v351
    %v353 = vadd.f32 %v352, %v44
    %v354 = vsub.f32 %v353, %v328
    %v355 = vsub.f32 0.0, %v199
    %v356 = vadd.f32 %v355, %v349
    %v357 = vmul.f32 %v356, 0.3
    %v358 = vadd.f32 %v199, %v357
    %v359 = vsub.f32 0.0, %v203
    %v360 = vadd.f32 %v359, %v354
    %v361 = vmul.f32 %v360, 0.3
    %v362 = vadd.f32 %v203, %v361
    %363 = vst.msk [vmem:[%s2 + $0x2] sm:$0x1] %vm204, %v358
    %364 = vst.msk [vmem:[%s2 + $0x3] sm:$0x1] %vm204, %v362
    %v365 = vmul.f32 %v358, -0.628
    %v366 = vadd.f32 %v365, -0.9602
    %v367 = vmul.f32 %v358, -2.1831
    %v368 = vmul.f32 %v367, %v358
    %v369 = vadd.f32 %v366, %v368
    %v370 = vmul.f32 %v358, 1.5359
    %v371 = vmul.f32 %v370, %v358
    %v372 = vmul.f32 %v371, %v358
    %v373 = vadd.f32 %v369, %v372
    %v374 = vmul.f32 %v237, 1.6686
    %v375 = vmul.f32 %v237, 1.2363
    %v376 = vmul.f32 %v375, %v237
    %v377 = vadd.f32 %v374, %v376
    %v378 = vmul.f32 %v237, -1.1509
    %v379 = vmul.f32 %v378, %v237
    %v380 = vmul.f32 %v379, %v237
    %v381 = vadd.f32 %v377, %v380
    %v382 = vmul.f32 %v358, 0.5227
    %v383 = vmul.f32 %v382, %v237
    %v384 = vmul.f32 %v358, -1.8543
    %v385 = vmul.f32 %v384, %v237
    %v386 = vmul.f32 %v385, %v237
    %v387 = vadd.f32 %v383, %v386
    %v388 = vmul.f32 %v358, -0.045
    %v389 = vmul.f32 %v388, %v358
    %v390 = vmul.f32 %v389, %v237
    %v391 = vadd.f32 %v387, %v390
    %v392 = vadd.f32 %v373, %v381
    %v393 = vadd.f32 %v392, %v391
    %v394 = vmul.f32 %v393, 0.3
    %v395 = vadd.f32 %v237, %v394
    %v396 = vmul.f32 %v358, -1.2903
    %v397 = vadd.f32 %v396, -1.204
    %v398 = vmul.f32 %v358, -1.5158
    %v399 = vmul.f32 %v398, %v358
    %v400 = vadd.f32 %v397, %v399
    %v401 = vmul.f32 %v358, -0.221
    %v402 = vmul.f32 %v401, %v358
    %v403 = vmul.f32 %v402, %v358
    %v404 = vadd.f32 %v400, %v403
    %v405 = vmul.f32 %v395, 0.6489
    %v406 = vmul.f32 %v395, 0.8607
    %v407 = vmul.f32 %v406, %v395
    %v408 = vadd.f32 %v405, %v407
    %v409 = vmul.f32 %v395, -0.8444
    %v410 = vmul.f32 %v409, %v395
    %v411 = vmul.f32 %v410, %v395
    %v412 = vadd.f32 %v408, %v411
    %v413 = vmul.f32 %v358, 0.2612
    %v414 = vmul.f32 %v413, %v395
    %v415 = vmul.f32 %v358, -0.4397
    %v416 = vmul.f32 %v415, %v395
    %v417 = vmul.f32 %v416, %v395
    %v418 = vadd.f32 %v414, %v417
    %v419 = vmul.f32 %v358, 1.0842
    %v420 = vmul.f32 %v419, %v358
    %v421 = vmul.f32 %v420, %v395
    %v422 = vadd.f32 %v418, %v421
    %v423 = vadd.f32 %v404, %v412
    %v424 = vadd.f32 %v423, %v422
    %v425 = vmul.f32 %v358, %v424
    %v426 = vmul.f32 %v362, -0.628
    %v427 = vadd.f32 %v426, -0.9602
    %v428 = vmul.f32 %v362, -2.1831
    %v429 = vmul.f32 %v428, %v362
    %v430 = vadd.f32 %v427, %v429
    %v431 = vmul.f32 %v362, 1.5359
    %v432 = vmul.f32 %v431, %v362
    %v433 = vmul.f32 %v432, %v362
    %v434 = vadd.f32 %v430, %v433
    %v435 = vmul.f32 %v298, 1.6686
    %v436 = vmul.f32 %v298, 1.2363
    %v437 = vmul.f32 %v436, %v298
    %v438 = vadd.f32 %v435, %v437
    %v439 = vmul.f32 %v298, -1.1509
    %v440 = vmul.f32 %v439, %v298
    %v441 = vmul.f32 %v440, %v298
    %v442 = vadd.f32 %v438, %v441
    %v443 = vmul.f32 %v362, 0.5227
    %v444 = vmul.f32 %v443, %v298
    %v445 = vmul.f32 %v362, -1.8543
    %v446 = vmul.f32 %v445, %v298
    %v447 = vmul.f32 %v446, %v298
    %v448 = vadd.f32 %v444, %v447
    %v449 = vmul.f32 %v362, -0.045
    %v450 = vmul.f32 %v449, %v362
    %v451 = vmul.f32 %v450, %v298
    %v452 = vadd.f32 %v448, %v451
    %v453 = vadd.f32 %v434, %v442
    %v454 = vadd.f32 %v453, %v452
    %v455 = vmul.f32 %v454, 0.3
    %v456 = vadd.f32 %v298, %v455
    %v457 = vmul.f32 %v362, -1.2903
    %v458 = vadd.f32 %v457, -1.204
    %v459 = vmul.f32 %v362, -1.5158
    %v460 = vmul.f32 %v459, %v362
    %v461 = vadd.f32 %v458, %v460
    %v462 = vmul.f32 %v362, -0.221
    %v463 = vmul.f32 %v462, %v362
    %v464 = vmul.f32 %v463, %v362
    %v465 = vadd.f32 %v461, %v464
    %v466 = vmul.f32 %v456, 0.6489
    %v467 = vmul.f32 %v456, 0.8607
    %v468 = vmul.f32 %v467, %v456
    %v469 = vadd.f32 %v466, %v468
    %v470 = vmul.f32 %v456, -0.8444
    %v471 = vmul.f32 %v470, %v456
    %v472 = vmul.f32 %v471, %v456
    %v473 = vadd.f32 %v469, %v472
    %v474 = vmul.f32 %v362, 0.2612
    %v475 = vmul.f32 %v474, %v456
    %v476 = vmul.f32 %v362, -0.4397
    %v477 = vmul.f32 %v476, %v456
    %v478 = vmul.f32 %v477, %v456
    %v479 = vadd.f32 %v475, %v478
    %v480 = vmul.f32 %v362, 1.0842
    %v481 = vmul.f32 %v480, %v362
    %v482 = vmul.f32 %v481, %v456
    %v483 = vadd.f32 %v479, %v482
    %v484 = vadd.f32 %v465, %v473
    %v485 = vadd.f32 %v484, %v483
    %v486 = vmul.f32 %v362, %v485
    %v487 = vsub.f32 %v358, 1.0
    %v488 = vmul.f32 %v487, 0.01
    %v489 = vadd.f32 %v488, 1.0
    %v490 = vmin.f32 %v358, %v489
    %v491 = vadd.f32 %v490, 1.0
    %v492 = vmul.f32 %v491, 0.01
    %v493 = vadd.f32 %v492, -1.0
    %v494 = vmax.f32 %v490, %v493
    %v495 = vsub.f32 %v362, 1.0
    %v496 = vmul.f32 %v495, 0.01
    %v497 = vadd.f32 %v496, 1.0
    %v498 = vmin.f32 %v362, %v497
    %v499 = vadd.f32 %v498, 1.0
    %v500 = vmul.f32 %v499, 0.01
    %v501 = vadd.f32 %v500, -1.0
    %v502 = vmax.f32 %v498, %v501
    %v503 = vmul.f32 %v183, %v494
    %v504 = vmul.f32 %v185, %v502
    %v505 = vadd.f32 %v503, %v504
    %v506 = vadd.f32 %v505, %v39
    %v507 = vsub.f32 %v506, %v425
    %v508 = vmul.f32 %v190, %v494
    %v509 = vmul.f32 %v183, %v502
    %v510 = vadd.f32 %v508, %v509
    %v511 = vadd.f32 %v510, %v44
    %v512 = vsub.f32 %v511, %v486
    %v513 = vsub.f32 0.0, %v358
    %v514 = vadd.f32 %v513, %v507
    %v515 = vmul.f32 %v514, 0.3
    %v516 = vadd.f32 %v358, %v515
    %v517 = vsub.f32 0.0, %v362
    %v518 = vadd.f32 %v517, %v512
    %v519 = vmul.f32 %v518, 0.3
    %v520 = vadd.f32 %v362, %v519
    %521 = vst.msk [vmem:[%s2 + $0x4] sm:$0x1] %vm204, %v516
    %522 = vst.msk [vmem:[%s2 + $0x5] sm:$0x1] %vm204, %v520
    %523 = vst.msk [vmem:[%s2 + $0x6] sm:$0x1] %vm204, %v494
    %524 = vst.msk [vmem:[%s2 + $0x7] sm:$0x1] %vm204, %v502
    // Predicated region
    $region14: #{memcenn_forward.1} parent=1 // pred_check
      _
    $region15: #{memcenn_forward.1} parent=1 // pred_check_branch
      %526 = sbr.rel (0) target = $region17
    $region16: #{memcenn_forward.1} parent=1 // pred_region
      _
    $region17: #{memcenn_forward.1} parent=1 // pred_fallthru
      _
    // Predicated region
    $region18: #{memcenn_forward.1} parent=1 // pred_check
      _
    $region19: #{memcenn_forward.1} parent=1 // pred_check_branch
      %528 = sbr.rel (0) target = $region21
    $region20: #{memcenn_forward.1} parent=1 // pred_region
      _
    $region21: #{memcenn_forward.1} parent=1 // pred_fallthru
      _
    %529 = vsyncpa [#allocation3], 1

</llo_original>
